<compile_context>
chip_gen: v6e
topology: v6e:2x2x1
jax: 0.10.0
libtpu: 0.0.40
codegen_flags: <defaults>
</compile_context>

<pallas_src>
import functools

import jax
import jax.numpy as jnp
from jax.experimental import pallas as pl
from jax.experimental.pallas import tpu as pltpu


def _decoder_kernel(z_ref, w_ref, b_ref, out_ref, *, o_len):
    """Whole autoregressive decode in one kernel invocation (no grid).

    z_ref  : (B_pad, H)        latent; h0 = c0 = x0 = z
    w_ref  : (3H, 4H)          rows [0,H)   = W_ih^T + W_hh^T            (t == 0)
                               rows [H,2H)  = W_last^T @ W_ih^T + W_hh^T (t >= 1)
                               rows [2H,3H), lanes [0,O) = W_last^T      (head)
    b_ref  : (8, 4H)           row 0 = b_ih + b_hh
                               row 1 = b_last @ W_ih^T + (b_ih + b_hh)
                               row 2, lanes [0,O) = b_last
    out_ref: (B_pad, o_len*O)  lane-dense output, final batch-major layout
    """
    B, H = z_ref.shape
    O = out_ref.shape[1] // o_len

    z = z_ref[...]

    # Hoisted weight/bias unpack + broadcasts (once per call, not per step).
    w0 = w_ref[0:H, :]              # (H, 4H)
    wc = w_ref[H:2 * H, :]          # (H, 4H)
    wl = w_ref[2 * H:3 * H, 0:O]    # (H, O)

    b0 = jnp.broadcast_to(b_ref[0:1, :], (B, 4 * H))
    bc = jnp.broadcast_to(b_ref[1:2, :], (B, 4 * H))
    bl = jnp.broadcast_to(b_ref[2:3, 0:O], (B, O))

    # Lane constants, built once: g-gate mask and the x/2 pre-scale that lets
    # sigmoid ride the same tanh call (sigmoid(x) = 0.5*(tanh(x/2)+1)), so each
    # step issues exactly ONE full-vreg EUP transcendental for the gate block.
    lane = jax.lax.broadcasted_iota(jnp.int32, (B, 4 * H), 1)
    g_mask = (lane >= 2 * H) & (lane < 3 * H)
    pre_scale = jnp.where(g_mask, 1.0, 0.5)

    h = z
    c = z
    for t in range(o_len):  # static unroll: o_len known at trace time
        gates = jnp.dot(h, w0 if t == 0 else wc,
                        preferred_element_type=jnp.float32)
        gates = gates + (b0 if t == 0 else bc)
        th = jnp.tanh(gates * pre_scale)
        act = jnp.where(g_mask, th, 0.5 * th + 0.5)   # i/f/o = sigmoid, g = tanh
        i_g = act[:, 0:H]
        f_g = act[:, H:2 * H]
        g_g = act[:, 2 * H:3 * H]
        o_g = act[:, 3 * H:4 * H]
        c = f_g * c + i_g * g_g
        h = o_g * jnp.tanh(c)
        # Output head y_t = h_t @ W_last^T + b_last.  Not consumed by the
        # recurrence (head is folded into wc), so this dot + store are off the
        # serial chain and overlap with step t+1.
        y = jnp.dot(h, wl, preferred_element_type=jnp.float32) + bl
        out_ref[:, t * O:(t + 1) * O] = y.astype(out_ref.dtype)


def make_vae_rnn_decoder(params, o_len):
    """Bind params once (all folds/packing hoisted); return a jitted forward."""
    w_ih, w_hh, b_ih, b_hh, w_last, b_last = params
    four_h, I = w_ih.shape
    H = w_hh.shape[1]
    O = w_last.shape[0]
    assert four_h == 4 * H
    # Forced by the autoregressive feedback of the reference forward.
    assert I == H and O == I, "rnn_forward requires t_channels == latent == o_channels"

    f32 = jnp.float32
    hi = jax.lax.Precision.HIGHEST          # prep-time only; keeps folds accurate
    wih_t = jnp.asarray(w_ih, f32).T        # (I, 4H)
    whh_t = jnp.asarray(w_hh, f32).T        # (H, 4H)
    wl_t = jnp.asarray(w_last, f32).T       # (H, O)
    b_gate = jnp.asarray(b_ih + b_hh, f32)[None, :]   # (1, 4H)
    bl = jnp.asarray(b_last, f32)[None, :]             # (1, O)

    w0 = wih_t + whh_t                                          # (H, 4H)
    wc = jnp.dot(wl_t, wih_t, precision=hi) + whh_t             # (H, 4H)
    bc = jnp.dot(bl, wih_t, precision=hi) + b_gate              # (1, 4H)

    # Packed operands: 3 HBM->VMEM copies total (z + two small slabs).
    w_pack = jnp.zeros((3 * H, 4 * H), f32)
    w_pack = w_pack.at[0:H, :].set(w0).at[H:2 * H, :].set(wc)
    w_pack = w_pack.at[2 * H:3 * H, 0:O].set(wl_t)

    b_pack = jnp.zeros((8, 4 * H), f32)
    b_pack = b_pack.at[0:1, :].set(b_gate).at[1:2, :].set(bc)
    b_pack = b_pack.at[2:3, 0:O].set(bl)

    w_pack = jax.device_put(w_pack)
    b_pack = jax.device_put(b_pack)

    kernel = functools.partial(_decoder_kernel, o_len=o_len)

    @jax.jit
    def forward(z):
        B = z.shape[0]
        B_pad = max(8, -(-B // 8) * 8)      # f32 sublane tile
        z_p = jnp.zeros((B_pad, H), f32).at[:B].set(z.astype(f32))
        vmem = pl.BlockSpec(memory_space=pltpu.MemorySpace.VMEM)
        out = pl.pallas_call(
            kernel,
            out_shape=jax.ShapeDtypeStruct((B_pad, o_len * O), f32),
            in_specs=[vmem, vmem, vmem],
            out_specs=vmem,
        )(z_p, w_pack, b_pack)
        # Lane-dense kernel output -> (B, o_len, O); only a tiny slice+reshape
        # left on the XLA side (no transpose).
        return out[:B].reshape(B, o_len, O)

    return forward


def _reference_forward(z, params, o_len):
    """Pure-JAX reference of the same semantics (source of truth, unfused)."""
    w_ih, w_hh, b_ih, b_hh, w_last, b_last = params
    H = w_hh.shape[1]
    h = c = x = z.astype(jnp.float32)
    outs = []
    for _ in range(o_len):
        gates = x @ w_ih.T + b_ih + h @ w_hh.T + b_hh
        i_g = jax.nn.sigmoid(gates[:, 0:H])
        f_g = jax.nn.sigmoid(gates[:, H:2 * H])
        g_g = jnp.tanh(gates[:, 2 * H:3 * H])
        o_g = jax.nn.sigmoid(gates[:, 3 * H:4 * H])
        c = f_g * c + i_g * g_g
        h = o_g * jnp.tanh(c)
        y = h @ w_last.T + b_last
        x = y
        outs.append(y[:, None, :])
    return jnp.concatenate(outs, axis=1)


def init_params(key, t_channels, hidden_size, o_channels):
    """Deterministic init matching PyTorch shapes: LSTM(I->H, 1 layer) + Linear(H->O)."""
    k1, k2, k3, k4, k5, k6 = jax.random.split(key, 6)
    s = 1.0 / jnp.sqrt(hidden_size)
    w_ih = jax.random.uniform(k1, (4 * hidden_size, t_channels), jnp.float32, -s, s)
    w_hh = jax.random.uniform(k2, (4 * hidden_size, hidden_size), jnp.float32, -s, s)
    b_ih = jax.random.uniform(k3, (4 * hidden_size,), jnp.float32, -s, s)
    b_hh = jax.random.uniform(k4, (4 * hidden_size,), jnp.float32, -s, s)
    w_last = jax.random.uniform(k5, (o_channels, hidden_size), jnp.float32, -s, s)
    b_last = jax.random.uniform(k6, (o_channels,), jnp.float32, -s, s)
    return (w_ih, w_hh, b_ih, b_hh, w_last, b_last)


if __name__ == "__main__":
    # layer_sizes = [(t_len=8, t_channels=32, latent_size=32), hidden_channels=64]
    # output_shape = (o_len=8, o_channels=32)
    B = 2
    t_len, t_channels, latent_size = 8, 32, 32
    o_len, o_channels = 8, 32
    hidden_size = latent_size

    key = jax.random.PRNGKey(0)
    kz, kp = jax.random.split(key)
    z = jax.random.normal(kz, (B, latent_size), jnp.float32)
    params = init_params(kp, t_channels, hidden_size, o_channels)

    decoder = make_vae_rnn_decoder(params, o_len)   # prep hoisted here, once
    out = decoder(z)
    out = jax.block_until_ready(out)

    ref = _reference_forward(z, params, o_len)
    assert out.shape == (B, o_len, o_channels)
    # Deliberate tolerance: head fold + tanh-based sigmoid change rounding
    # slightly vs the unfused reference (all math still f32).
    assert jnp.allclose(out, ref, atol=1e-4, rtol=1e-4)
    print("KERNEL_OK")
</pallas_src>

<mosaic_0001>
module attributes {stable_mosaic.version = 11 : i64} {
  func.func @_decoder_kernel(%arg0: memref<8x32xf32, #tpu.memory_space<vmem>>, %arg1: memref<96x128xf32, #tpu.memory_space<vmem>>, %arg2: memref<8x128xf32, #tpu.memory_space<vmem>>, %arg3: memref<8x256xf32, #tpu.memory_space<vmem>>) attributes {dimension_semantics = [], scalar_prefetch = 0 : i64, scratch_operands = 0 : i64, tpu.core_type = #tpu.core_type<tc>} {
    %c0 = arith.constant 0 : index
    %c0_0 = arith.constant 0 : index
    %0 = vector.load %arg0[%c0, %c0_0] : memref<8x32xf32, #tpu.memory_space<vmem>>, vector<8x32xf32>
    %c0_1 = arith.constant 0 : index
    %c0_2 = arith.constant 0 : index
    %1 = vector.load %arg1[%c0_1, %c0_2] : memref<96x128xf32, #tpu.memory_space<vmem>>, vector<32x128xf32>
    %c32 = arith.constant 32 : index
    %c0_3 = arith.constant 0 : index
    %2 = vector.load %arg1[%c32, %c0_3] : memref<96x128xf32, #tpu.memory_space<vmem>>, vector<32x128xf32>
    %c64 = arith.constant 64 : index
    %c0_4 = arith.constant 0 : index
    %3 = vector.load %arg1[%c64, %c0_4] : memref<96x128xf32, #tpu.memory_space<vmem>>, vector<32x32xf32>
    %c0_5 = arith.constant 0 : index
    %c0_6 = arith.constant 0 : index
    %4 = vector.load %arg2[%c0_5, %c0_6] : memref<8x128xf32, #tpu.memory_space<vmem>>, vector<1x128xf32>
    %5 = vector.shape_cast %4 : vector<1x128xf32> to vector<1x128xf32>
    %6 = vector.broadcast %5 : vector<1x128xf32> to vector<8x128xf32>
    %c1 = arith.constant 1 : index
    %c0_7 = arith.constant 0 : index
    %7 = vector.load %arg2[%c1, %c0_7] : memref<8x128xf32, #tpu.memory_space<vmem>>, vector<1x128xf32>
    %8 = vector.shape_cast %7 : vector<1x128xf32> to vector<1x128xf32>
    %9 = vector.broadcast %8 : vector<1x128xf32> to vector<8x128xf32>
    %c2 = arith.constant 2 : index
    %c0_8 = arith.constant 0 : index
    %10 = vector.load %arg2[%c2, %c0_8] : memref<8x128xf32, #tpu.memory_space<vmem>>, vector<1x32xf32>
    %11 = vector.shape_cast %10 : vector<1x32xf32> to vector<1x32xf32>
    %12 = vector.broadcast %11 : vector<1x32xf32> to vector<8x32xf32>
    %13 = tpu.iota {dimensions = array<i32: 1>} : vector<8x128xi32>
    %c64_i32 = arith.constant 64 : i32
    %14 = vector.broadcast %c64_i32 : i32 to vector<8x128xi32>
    %15 = arith.cmpi sge, %13, %14 : vector<8x128xi32>
    %c96_i32 = arith.constant 96 : i32
    %16 = vector.broadcast %c96_i32 : i32 to vector<8x128xi32>
    %17 = arith.cmpi slt, %13, %16 : vector<8x128xi32>
    %18 = arith.andi %15, %17 : vector<8x128xi1>
    %cst = arith.constant 1.000000e+00 : f32
    %cst_9 = arith.constant 5.000000e-01 : f32
    %19 = vector.broadcast %cst : f32 to vector<8x128xf32>
    %20 = vector.broadcast %cst_9 : f32 to vector<8x128xf32>
    %21 = arith.select %18, %19, %20 : vector<8x128xi1>, vector<8x128xf32>
    %cst_10 = arith.constant dense<0.000000e+00> : vector<8x128xf32>
    %22 = tpu.matmul %0, %1, %cst_10 {dimension_numbers = #tpu.dot_dimension_numbers<[1], [0], [0], [1], [0, 0, 1, 1], [], []>} : vector<8x32xf32>, vector<32x128xf32>, vector<8x128xf32> -> vector<8x128xf32>
    %23 = arith.addf %22, %6 : vector<8x128xf32>
    %24 = arith.mulf %23, %21 : vector<8x128xf32>
    %25 = math.tanh %24 : vector<8x128xf32>
    %cst_11 = arith.constant 5.000000e-01 : f32
    %26 = vector.broadcast %cst_11 : f32 to vector<8x128xf32>
    %27 = arith.mulf %26, %25 : vector<8x128xf32>
    %cst_12 = arith.constant 5.000000e-01 : f32
    %28 = vector.broadcast %cst_12 : f32 to vector<8x128xf32>
    %29 = arith.addf %27, %28 : vector<8x128xf32>
    %30 = arith.select %18, %25, %29 : vector<8x128xi1>, vector<8x128xf32>
    %31 = vector.extract_strided_slice %30 {offsets = [0, 0], sizes = [8, 32], strides = [1, 1]} : vector<8x128xf32> to vector<8x32xf32>
    %32 = vector.extract_strided_slice %30 {offsets = [0, 32], sizes = [8, 32], strides = [1, 1]} : vector<8x128xf32> to vector<8x32xf32>
    %33 = vector.extract_strided_slice %30 {offsets = [0, 64], sizes = [8, 32], strides = [1, 1]} : vector<8x128xf32> to vector<8x32xf32>
    %34 = vector.extract_strided_slice %30 {offsets = [0, 96], sizes = [8, 32], strides = [1, 1]} : vector<8x128xf32> to vector<8x32xf32>
    %35 = arith.mulf %32, %0 : vector<8x32xf32>
    %36 = arith.mulf %31, %33 : vector<8x32xf32>
    %37 = arith.addf %35, %36 : vector<8x32xf32>
    %38 = math.tanh %37 : vector<8x32xf32>
    %39 = arith.mulf %34, %38 : vector<8x32xf32>
    %cst_13 = arith.constant dense<0.000000e+00> : vector<8x32xf32>
    %40 = tpu.matmul %39, %3, %cst_13 {dimension_numbers = #tpu.dot_dimension_numbers<[1], [0], [0], [1], [0, 0, 1, 1], [], []>} : vector<8x32xf32>, vector<32x32xf32>, vector<8x32xf32> -> vector<8x32xf32>
    %41 = arith.addf %40, %12 : vector<8x32xf32>
    %c0_14 = arith.constant 0 : index
    %c0_15 = arith.constant 0 : index
    %42 = vector.load %arg3[%c0_14, %c0_15] : memref<8x256xf32, #tpu.memory_space<vmem>>, vector<8x32xf32>
    tpu.vector_store %arg3[%c0_14, %c0_15], %41 {strides = array<i32>} : memref<8x256xf32, #tpu.memory_space<vmem>>, vector<8x32xf32>,
    %cst_16 = arith.constant dense<0.000000e+00> : vector<8x128xf32>
    %43 = tpu.matmul %39, %2, %cst_16 {dimension_numbers = #tpu.dot_dimension_numbers<[1], [0], [0], [1], [0, 0, 1, 1], [], []>} : vector<8x32xf32>, vector<32x128xf32>, vector<8x128xf32> -> vector<8x128xf32>
    %44 = arith.addf %43, %9 : vector<8x128xf32>
    %45 = arith.mulf %44, %21 : vector<8x128xf32>
    %46 = math.tanh %45 : vector<8x128xf32>
    %cst_17 = arith.constant 5.000000e-01 : f32
    %47 = vector.broadcast %cst_17 : f32 to vector<8x128xf32>
    %48 = arith.mulf %47, %46 : vector<8x128xf32>
    %cst_18 = arith.constant 5.000000e-01 : f32
    %49 = vector.broadcast %cst_18 : f32 to vector<8x128xf32>
    %50 = arith.addf %48, %49 : vector<8x128xf32>
    %51 = arith.select %18, %46, %50 : vector<8x128xi1>, vector<8x128xf32>
    %52 = vector.extract_strided_slice %51 {offsets = [0, 0], sizes = [8, 32], strides = [1, 1]} : vector<8x128xf32> to vector<8x32xf32>
    %53 = vector.extract_strided_slice %51 {offsets = [0, 32], sizes = [8, 32], strides = [1, 1]} : vector<8x128xf32> to vector<8x32xf32>
    %54 = vector.extract_strided_slice %51 {offsets = [0, 64], sizes = [8, 32], strides = [1, 1]} : vector<8x128xf32> to vector<8x32xf32>
    %55 = vector.extract_strided_slice %51 {offsets = [0, 96], sizes = [8, 32], strides = [1, 1]} : vector<8x128xf32> to vector<8x32xf32>
    %56 = arith.mulf %53, %37 : vector<8x32xf32>
    %57 = arith.mulf %52, %54 : vector<8x32xf32>
    %58 = arith.addf %56, %57 : vector<8x32xf32>
    %59 = math.tanh %58 : vector<8x32xf32>
    %60 = arith.mulf %55, %59 : vector<8x32xf32>
    %cst_19 = arith.constant dense<0.000000e+00> : vector<8x32xf32>
    %61 = tpu.matmul %60, %3, %cst_19 {dimension_numbers = #tpu.dot_dimension_numbers<[1], [0], [0], [1], [0, 0, 1, 1], [], []>} : vector<8x32xf32>, vector<32x32xf32>, vector<8x32xf32> -> vector<8x32xf32>
    %62 = arith.addf %61, %12 : vector<8x32xf32>
    %c0_20 = arith.constant 0 : index
    %c32_21 = arith.constant 32 : index
    %63 = vector.load %arg3[%c0_20, %c32_21] : memref<8x256xf32, #tpu.memory_space<vmem>>, vector<8x32xf32>
    tpu.vector_store %arg3[%c0_20, %c32_21], %62 {strides = array<i32>} : memref<8x256xf32, #tpu.memory_space<vmem>>, vector<8x32xf32>,
    %cst_22 = arith.constant dense<0.000000e+00> : vector<8x128xf32>
    %64 = tpu.matmul %60, %2, %cst_22 {dimension_numbers = #tpu.dot_dimension_numbers<[1], [0], [0], [1], [0, 0, 1, 1], [], []>} : vector<8x32xf32>, vector<32x128xf32>, vector<8x128xf32> -> vector<8x128xf32>
    %65 = arith.addf %64, %9 : vector<8x128xf32>
    %66 = arith.mulf %65, %21 : vector<8x128xf32>
    %67 = math.tanh %66 : vector<8x128xf32>
    %cst_23 = arith.constant 5.000000e-01 : f32
    %68 = vector.broadcast %cst_23 : f32 to vector<8x128xf32>
    %69 = arith.mulf %68, %67 : vector<8x128xf32>
    %cst_24 = arith.constant 5.000000e-01 : f32
    %70 = vector.broadcast %cst_24 : f32 to vector<8x128xf32>
    %71 = arith.addf %69, %70 : vector<8x128xf32>
    %72 = arith.select %18, %67, %71 : vector<8x128xi1>, vector<8x128xf32>
    %73 = vector.extract_strided_slice %72 {offsets = [0, 0], sizes = [8, 32], strides = [1, 1]} : vector<8x128xf32> to vector<8x32xf32>
    %74 = vector.extract_strided_slice %72 {offsets = [0, 32], sizes = [8, 32], strides = [1, 1]} : vector<8x128xf32> to vector<8x32xf32>
    %75 = vector.extract_strided_slice %72 {offsets = [0, 64], sizes = [8, 32], strides = [1, 1]} : vector<8x128xf32> to vector<8x32xf32>
    %76 = vector.extract_strided_slice %72 {offsets = [0, 96], sizes = [8, 32], strides = [1, 1]} : vector<8x128xf32> to vector<8x32xf32>
    %77 = arith.mulf %74, %58 : vector<8x32xf32>
    %78 = arith.mulf %73, %75 : vector<8x32xf32>
    %79 = arith.addf %77, %78 : vector<8x32xf32>
    %80 = math.tanh %79 : vector<8x32xf32>
    %81 = arith.mulf %76, %80 : vector<8x32xf32>
    %cst_25 = arith.constant dense<0.000000e+00> : vector<8x32xf32>
    %82 = tpu.matmul %81, %3, %cst_25 {dimension_numbers = #tpu.dot_dimension_numbers<[1], [0], [0], [1], [0, 0, 1, 1], [], []>} : vector<8x32xf32>, vector<32x32xf32>, vector<8x32xf32> -> vector<8x32xf32>
    %83 = arith.addf %82, %12 : vector<8x32xf32>
    %c0_26 = arith.constant 0 : index
    %c64_27 = arith.constant 64 : index
    %84 = vector.load %arg3[%c0_26, %c64_27] : memref<8x256xf32, #tpu.memory_space<vmem>>, vector<8x32xf32>
    tpu.vector_store %arg3[%c0_26, %c64_27], %83 {strides = array<i32>} : memref<8x256xf32, #tpu.memory_space<vmem>>, vector<8x32xf32>,
    %cst_28 = arith.constant dense<0.000000e+00> : vector<8x128xf32>
    %85 = tpu.matmul %81, %2, %cst_28 {dimension_numbers = #tpu.dot_dimension_numbers<[1], [0], [0], [1], [0, 0, 1, 1], [], []>} : vector<8x32xf32>, vector<32x128xf32>, vector<8x128xf32> -> vector<8x128xf32>
    %86 = arith.addf %85, %9 : vector<8x128xf32>
    %87 = arith.mulf %86, %21 : vector<8x128xf32>
    %88 = math.tanh %87 : vector<8x128xf32>
    %cst_29 = arith.constant 5.000000e-01 : f32
    %89 = vector.broadcast %cst_29 : f32 to vector<8x128xf32>
    %90 = arith.mulf %89, %88 : vector<8x128xf32>
    %cst_30 = arith.constant 5.000000e-01 : f32
    %91 = vector.broadcast %cst_30 : f32 to vector<8x128xf32>
    %92 = arith.addf %90, %91 : vector<8x128xf32>
    %93 = arith.select %18, %88, %92 : vector<8x128xi1>, vector<8x128xf32>
    %94 = vector.extract_strided_slice %93 {offsets = [0, 0], sizes = [8, 32], strides = [1, 1]} : vector<8x128xf32> to vector<8x32xf32>
    %95 = vector.extract_strided_slice %93 {offsets = [0, 32], sizes = [8, 32], strides = [1, 1]} : vector<8x128xf32> to vector<8x32xf32>
    %96 = vector.extract_strided_slice %93 {offsets = [0, 64], sizes = [8, 32], strides = [1, 1]} : vector<8x128xf32> to vector<8x32xf32>
    %97 = vector.extract_strided_slice %93 {offsets = [0, 96], sizes = [8, 32], strides = [1, 1]} : vector<8x128xf32> to vector<8x32xf32>
    %98 = arith.mulf %95, %79 : vector<8x32xf32>
    %99 = arith.mulf %94, %96 : vector<8x32xf32>
    %100 = arith.addf %98, %99 : vector<8x32xf32>
    %101 = math.tanh %100 : vector<8x32xf32>
    %102 = arith.mulf %97, %101 : vector<8x32xf32>
    %cst_31 = arith.constant dense<0.000000e+00> : vector<8x32xf32>
    %103 = tpu.matmul %102, %3, %cst_31 {dimension_numbers = #tpu.dot_dimension_numbers<[1], [0], [0], [1], [0, 0, 1, 1], [], []>} : vector<8x32xf32>, vector<32x32xf32>, vector<8x32xf32> -> vector<8x32xf32>
    %104 = arith.addf %103, %12 : vector<8x32xf32>
    %c0_32 = arith.constant 0 : index
    %c96 = arith.constant 96 : index
    %105 = vector.load %arg3[%c0_32, %c96] : memref<8x256xf32, #tpu.memory_space<vmem>>, vector<8x32xf32>
    tpu.vector_store %arg3[%c0_32, %c96], %104 {strides = array<i32>} : memref<8x256xf32, #tpu.memory_space<vmem>>, vector<8x32xf32>,
    %cst_33 = arith.constant dense<0.000000e+00> : vector<8x128xf32>
    %106 = tpu.matmul %102, %2, %cst_33 {dimension_numbers = #tpu.dot_dimension_numbers<[1], [0], [0], [1], [0, 0, 1, 1], [], []>} : vector<8x32xf32>, vector<32x128xf32>, vector<8x128xf32> -> vector<8x128xf32>
    %107 = arith.addf %106, %9 : vector<8x128xf32>
    %108 = arith.mulf %107, %21 : vector<8x128xf32>
    %109 = math.tanh %108 : vector<8x128xf32>
    %cst_34 = arith.constant 5.000000e-01 : f32
    %110 = vector.broadcast %cst_34 : f32 to vector<8x128xf32>
    %111 = arith.mulf %110, %109 : vector<8x128xf32>
    %cst_35 = arith.constant 5.000000e-01 : f32
    %112 = vector.broadcast %cst_35 : f32 to vector<8x128xf32>
    %113 = arith.addf %111, %112 : vector<8x128xf32>
    %114 = arith.select %18, %109, %113 : vector<8x128xi1>, vector<8x128xf32>
    %115 = vector.extract_strided_slice %114 {offsets = [0, 0], sizes = [8, 32], strides = [1, 1]} : vector<8x128xf32> to vector<8x32xf32>
    %116 = vector.extract_strided_slice %114 {offsets = [0, 32], sizes = [8, 32], strides = [1, 1]} : vector<8x128xf32> to vector<8x32xf32>
    %117 = vector.extract_strided_slice %114 {offsets = [0, 64], sizes = [8, 32], strides = [1, 1]} : vector<8x128xf32> to vector<8x32xf32>
    %118 = vector.extract_strided_slice %114 {offsets = [0, 96], sizes = [8, 32], strides = [1, 1]} : vector<8x128xf32> to vector<8x32xf32>
    %119 = arith.mulf %116, %100 : vector<8x32xf32>
    %120 = arith.mulf %115, %117 : vector<8x32xf32>
    %121 = arith.addf %119, %120 : vector<8x32xf32>
    %122 = math.tanh %121 : vector<8x32xf32>
    %123 = arith.mulf %118, %122 : vector<8x32xf32>
    %cst_36 = arith.constant dense<0.000000e+00> : vector<8x32xf32>
    %124 = tpu.matmul %123, %3, %cst_36 {dimension_numbers = #tpu.dot_dimension_numbers<[1], [0], [0], [1], [0, 0, 1, 1], [], []>} : vector<8x32xf32>, vector<32x32xf32>, vector<8x32xf32> -> vector<8x32xf32>
    %125 = arith.addf %124, %12 : vector<8x32xf32>
    %c0_37 = arith.constant 0 : index
    %c128 = arith.constant 128 : index
    %126 = vector.load %arg3[%c0_37, %c128] : memref<8x256xf32, #tpu.memory_space<vmem>>, vector<8x32xf32>
    tpu.vector_store %arg3[%c0_37, %c128], %125 {strides = array<i32>} : memref<8x256xf32, #tpu.memory_space<vmem>>, vector<8x32xf32>,
    %cst_38 = arith.constant dense<0.000000e+00> : vector<8x128xf32>
    %127 = tpu.matmul %123, %2, %cst_38 {dimension_numbers = #tpu.dot_dimension_numbers<[1], [0], [0], [1], [0, 0, 1, 1], [], []>} : vector<8x32xf32>, vector<32x128xf32>, vector<8x128xf32> -> vector<8x128xf32>
    %128 = arith.addf %127, %9 : vector<8x128xf32>
    %129 = arith.mulf %128, %21 : vector<8x128xf32>
    %130 = math.tanh %129 : vector<8x128xf32>
    %cst_39 = arith.constant 5.000000e-01 : f32
    %131 = vector.broadcast %cst_39 : f32 to vector<8x128xf32>
    %132 = arith.mulf %131, %130 : vector<8x128xf32>
    %cst_40 = arith.constant 5.000000e-01 : f32
    %133 = vector.broadcast %cst_40 : f32 to vector<8x128xf32>
    %134 = arith.addf %132, %133 : vector<8x128xf32>
    %135 = arith.select %18, %130, %134 : vector<8x128xi1>, vector<8x128xf32>
    %136 = vector.extract_strided_slice %135 {offsets = [0, 0], sizes = [8, 32], strides = [1, 1]} : vector<8x128xf32> to vector<8x32xf32>
    %137 = vector.extract_strided_slice %135 {offsets = [0, 32], sizes = [8, 32], strides = [1, 1]} : vector<8x128xf32> to vector<8x32xf32>
    %138 = vector.extract_strided_slice %135 {offsets = [0, 64], sizes = [8, 32], strides = [1, 1]} : vector<8x128xf32> to vector<8x32xf32>
    %139 = vector.extract_strided_slice %135 {offsets = [0, 96], sizes = [8, 32], strides = [1, 1]} : vector<8x128xf32> to vector<8x32xf32>
    %140 = arith.mulf %137, %121 : vector<8x32xf32>
    %141 = arith.mulf %136, %138 : vector<8x32xf32>
    %142 = arith.addf %140, %141 : vector<8x32xf32>
    %143 = math.tanh %142 : vector<8x32xf32>
    %144 = arith.mulf %139, %143 : vector<8x32xf32>
    %cst_41 = arith.constant dense<0.000000e+00> : vector<8x32xf32>
    %145 = tpu.matmul %144, %3, %cst_41 {dimension_numbers = #tpu.dot_dimension_numbers<[1], [0], [0], [1], [0, 0, 1, 1], [], []>} : vector<8x32xf32>, vector<32x32xf32>, vector<8x32xf32> -> vector<8x32xf32>
    %146 = arith.addf %145, %12 : vector<8x32xf32>
    %c0_42 = arith.constant 0 : index
    %c160 = arith.constant 160 : index
    %147 = vector.load %arg3[%c0_42, %c160] : memref<8x256xf32, #tpu.memory_space<vmem>>, vector<8x32xf32>
    tpu.vector_store %arg3[%c0_42, %c160], %146 {strides = array<i32>} : memref<8x256xf32, #tpu.memory_space<vmem>>, vector<8x32xf32>,
    %cst_43 = arith.constant dense<0.000000e+00> : vector<8x128xf32>
    %148 = tpu.matmul %144, %2, %cst_43 {dimension_numbers = #tpu.dot_dimension_numbers<[1], [0], [0], [1], [0, 0, 1, 1], [], []>} : vector<8x32xf32>, vector<32x128xf32>, vector<8x128xf32> -> vector<8x128xf32>
    %149 = arith.addf %148, %9 : vector<8x128xf32>
    %150 = arith.mulf %149, %21 : vector<8x128xf32>
    %151 = math.tanh %150 : vector<8x128xf32>
    %cst_44 = arith.constant 5.000000e-01 : f32
    %152 = vector.broadcast %cst_44 : f32 to vector<8x128xf32>
    %153 = arith.mulf %152, %151 : vector<8x128xf32>
    %cst_45 = arith.constant 5.000000e-01 : f32
    %154 = vector.broadcast %cst_45 : f32 to vector<8x128xf32>
    %155 = arith.addf %153, %154 : vector<8x128xf32>
    %156 = arith.select %18, %151, %155 : vector<8x128xi1>, vector<8x128xf32>
    %157 = vector.extract_strided_slice %156 {offsets = [0, 0], sizes = [8, 32], strides = [1, 1]} : vector<8x128xf32> to vector<8x32xf32>
    %158 = vector.extract_strided_slice %156 {offsets = [0, 32], sizes = [8, 32], strides = [1, 1]} : vector<8x128xf32> to vector<8x32xf32>
    %159 = vector.extract_strided_slice %156 {offsets = [0, 64], sizes = [8, 32], strides = [1, 1]} : vector<8x128xf32> to vector<8x32xf32>
    %160 = vector.extract_strided_slice %156 {offsets = [0, 96], sizes = [8, 32], strides = [1, 1]} : vector<8x128xf32> to vector<8x32xf32>
    %161 = arith.mulf %158, %142 : vector<8x32xf32>
    %162 = arith.mulf %157, %159 : vector<8x32xf32>
    %163 = arith.addf %161, %162 : vector<8x32xf32>
    %164 = math.tanh %163 : vector<8x32xf32>
    %165 = arith.mulf %160, %164 : vector<8x32xf32>
    %cst_46 = arith.constant dense<0.000000e+00> : vector<8x32xf32>
    %166 = tpu.matmul %165, %3, %cst_46 {dimension_numbers = #tpu.dot_dimension_numbers<[1], [0], [0], [1], [0, 0, 1, 1], [], []>} : vector<8x32xf32>, vector<32x32xf32>, vector<8x32xf32> -> vector<8x32xf32>
    %167 = arith.addf %166, %12 : vector<8x32xf32>
    %c0_47 = arith.constant 0 : index
    %c192 = arith.constant 192 : index
    %168 = vector.load %arg3[%c0_47, %c192] : memref<8x256xf32, #tpu.memory_space<vmem>>, vector<8x32xf32>
    tpu.vector_store %arg3[%c0_47, %c192], %167 {strides = array<i32>} : memref<8x256xf32, #tpu.memory_space<vmem>>, vector<8x32xf32>,
    %cst_48 = arith.constant dense<0.000000e+00> : vector<8x128xf32>
    %169 = tpu.matmul %165, %2, %cst_48 {dimension_numbers = #tpu.dot_dimension_numbers<[1], [0], [0], [1], [0, 0, 1, 1], [], []>} : vector<8x32xf32>, vector<32x128xf32>, vector<8x128xf32> -> vector<8x128xf32>
    %170 = arith.addf %169, %9 : vector<8x128xf32>
    %171 = arith.mulf %170, %21 : vector<8x128xf32>
    %172 = math.tanh %171 : vector<8x128xf32>
    %cst_49 = arith.constant 5.000000e-01 : f32
    %173 = vector.broadcast %cst_49 : f32 to vector<8x128xf32>
    %174 = arith.mulf %173, %172 : vector<8x128xf32>
    %cst_50 = arith.constant 5.000000e-01 : f32
    %175 = vector.broadcast %cst_50 : f32 to vector<8x128xf32>
    %176 = arith.addf %174, %175 : vector<8x128xf32>
    %177 = arith.select %18, %172, %176 : vector<8x128xi1>, vector<8x128xf32>
    %178 = vector.extract_strided_slice %177 {offsets = [0, 0], sizes = [8, 32], strides = [1, 1]} : vector<8x128xf32> to vector<8x32xf32>
    %179 = vector.extract_strided_slice %177 {offsets = [0, 32], sizes = [8, 32], strides = [1, 1]} : vector<8x128xf32> to vector<8x32xf32>
    %180 = vector.extract_strided_slice %177 {offsets = [0, 64], sizes = [8, 32], strides = [1, 1]} : vector<8x128xf32> to vector<8x32xf32>
    %181 = vector.extract_strided_slice %177 {offsets = [0, 96], sizes = [8, 32], strides = [1, 1]} : vector<8x128xf32> to vector<8x32xf32>
    %182 = arith.mulf %179, %163 : vector<8x32xf32>
    %183 = arith.mulf %178, %180 : vector<8x32xf32>
    %184 = arith.addf %182, %183 : vector<8x32xf32>
    %185 = math.tanh %184 : vector<8x32xf32>
    %186 = arith.mulf %181, %185 : vector<8x32xf32>
    %cst_51 = arith.constant dense<0.000000e+00> : vector<8x32xf32>
    %187 = tpu.matmul %186, %3, %cst_51 {dimension_numbers = #tpu.dot_dimension_numbers<[1], [0], [0], [1], [0, 0, 1, 1], [], []>} : vector<8x32xf32>, vector<32x32xf32>, vector<8x32xf32> -> vector<8x32xf32>
    %188 = arith.addf %187, %12 : vector<8x32xf32>
    %c0_52 = arith.constant 0 : index
    %c224 = arith.constant 224 : index
    %189 = vector.load %arg3[%c0_52, %c224] : memref<8x256xf32, #tpu.memory_space<vmem>>, vector<8x32xf32>
    tpu.vector_store %arg3[%c0_52, %c224], %188 {strides = array<i32>} : memref<8x256xf32, #tpu.memory_space<vmem>>, vector<8x32xf32>,
    return
  }
}

</mosaic_0001>

<llo_original>
// kernel: forward.1
$region0: #{forward.1}
  #allocation0 [shape = 'u32[]', space=smem, size = 0x4, offset = 0x4, fixed_abs, tag = 'smem constant byte address 0x4 - core index']
  #allocation1 [shape = 'u32[144,128]{1,0:T(1,128)}', space=vmem, size = 0x12000, scoped, tag = 'internal scratch']
  %s0 = inlined_call_operand.vmem [shape: f32[8,32], index: 0, kind: input, shape index: {}]
  %s1 = inlined_call_operand.hbm [shape: f32[96,128], index: 1, kind: input, shape index: {}]
  %s2 = inlined_call_operand.vmem [shape: f32[8,128], index: 2, kind: input, shape index: {}]
  %s3 = inlined_call_operand.vmem [shape: f32[8,256], index: 3, kind: output, shape index: {}]
  %s4 = sld [smem:[#allocation0]]
  $region26: #{forward.1} parent=0
    _
  %s6 = ssub.s32 1, %s4
  %s7 = scalar_select 0, %s6, %s4
  $region1: #{forward.1} parent=0
    #allocation2 [shape = 'u8[49152]{0}', space=vmem, size = 0xc000, scoped, tag = 'input window, operand 1, single buffered']
    #allocation3 [shape = 's32[1]{0}', space=sflag, size = 0x4, scoped, tag = 'scoped memory for forward.1']
    %8 = vsyncpa [#allocation3], 0
    // Predicated region
    $region2: #{forward.1} parent=1 // pred_check
      _
    $region3: #{forward.1} parent=1 // pred_check_branch
      %10 = sbr.rel (0) target = $region5
    $region4: #{forward.1} parent=1 // pred_region
      _
    $region5: #{forward.1} parent=1 // pred_fallthru
      _
    // Predicated region
    $region6: #{forward.1} parent=1 // pred_check
      _
    $region7: #{forward.1} parent=1 // pred_check_branch
      %12 = sbr.rel (0) target = $region9
    $region8: #{forward.1} parent=1 // pred_region
      %s14 = ssub.s32 1536, 1536
      %15 = vsyncadd [#allocation3], %s14
      %s16 = sshll.u32 [#allocation2], 4
      %s17 = int_to_ptr.vmem [resolvable:$true] %s16
      %22 = dma.hbm_to_vmem [thread:$0]  %s1, 1536, %s17, [#allocation3], 128, 128, 8
    $region9: #{forward.1} parent=1 // pred_fallthru
      _
    // Predicated region
    $region10: #{forward.1} parent=1 // pred_check
      _
    $region11: #{forward.1} parent=1 // pred_check_branch
      %24 = sbr.rel (0) target = $region13
    $region12: #{forward.1} parent=1 // pred_region
      _
    $region13: #{forward.1} parent=1 // pred_fallthru
      _
    // Predicated region
    $region14: #{forward.1} parent=1 // pred_check
      _
    $region15: #{forward.1} parent=1 // pred_check_branch
      %26 = sbr.rel (0) target = $region17
    $region16: #{forward.1} parent=1 // pred_region
      %27 = dma.done [#allocation3], 1536
    $region17: #{forward.1} parent=1 // pred_fallthru
      _
    %v28 = vld [vmem:[%s0] sm:$0xff]
    %v29 = vld [vmem:[#allocation2] sm:$0xff]
    %v30 = vld [vmem:[#allocation2 + $0x8] sm:$0xff]
    %v31 = vld [vmem:[#allocation2 + $0x10] sm:$0xff]
    %v32 = vld [vmem:[#allocation2 + $0x18] sm:$0xff]
    %v33 = vld [vmem:[#allocation2 + $0x20] sm:$0xff]
    %v34 = vld [vmem:[#allocation2 + $0x28] sm:$0xff]
    %v35 = vld [vmem:[#allocation2 + $0x30] sm:$0xff]
    %v36 = vld [vmem:[#allocation2 + $0x38] sm:$0xff]
    %v37 = vld [vmem:[#allocation2 + $0x40] sm:$0xff]
    %v38 = vld [vmem:[#allocation2 + $0x48] sm:$0xff]
    %v39 = vld [vmem:[#allocation2 + $0x50] sm:$0xff]
    %v40 = vld [vmem:[#allocation2 + $0x58] sm:$0xff]
    %v41 = vld [vmem:[%s2] sm:$0x1]
    %v42 = vlaneseq
    %v43 = vshrl.u32 %v42, 7
    %v44 = vsub.s32 0, %v43
    %v45 = vrot.slane %v41, %v44
    %v46 = vld [vmem:[%s2 + $0x1] sm:$0x1]
    %v47 = vlaneseq
    %v48 = vshrl.u32 %v47, 7
    %v49 = vsub.s32 0, %v48
    %v50 = vrot.slane %v46, %v49
    %v51 = vld [vmem:[%s2 + $0x2] sm:$0x1]
    %v52 = vlaneseq
    %v53 = vshrl.u32 %v52, 7
    %v54 = vsub.s32 0, %v53
    %v55 = vrot.slane %v51, %v54
    %v56 = vlaneseq
    %v57 = vand.u32 %v56, 127
    %vm58 = vcmp.ge.s32.totalorder %v57, 64
    %vm59 = vcmp.lt.s32.totalorder %v57, 96
    %vm60 = vmand %vm58, %vm59
    %v61 = vsel %vm60, 1.0, 0.5
    %vm62 = vcmask 261120
    %v64 = vsel %vm62, %v28, 0
    %66 = vmatprep.subr.mxu0 0.0
    %67 = vmatpush1.msra.mxu0 0.0
    %68 = vmatprep.subr.mxu0 0.0
    %69 = vmatpush1.msra.mxu0 0.0
    %70 = vmatprep.subr.mxu0 0.0
    %71 = vmatpush1.msra.mxu0 0.0
    %72 = vmatprep.subr.mxu0 0.0
    %73 = vmatpush1.msra.mxu0 0.0
    %74 = vmatprep.subr.mxu0 0.0
    %75 = vmatpush1.msra.mxu0 0.0
    %76 = vmatprep.subr.mxu0 0.0
    %77 = vmatpush1.msra.mxu0 0.0
    %78 = vmatprep.subr.mxu0 0.0
    %79 = vmatpush1.msra.mxu0 0.0
    %80 = vmatprep.subr.mxu0 0.0
    %81 = vmatpush1.msra.mxu0 0.0
    %82 = vmatprep.subr.mxu0 0.0
    %83 = vmatpush1.msra.mxu0 0.0
    %84 = vmatprep.subr.mxu0 0.0
    %85 = vmatpush1.msra.mxu0 0.0
    %86 = vmatprep.subr.mxu0 0.0
    %87 = vmatpush1.msra.mxu0 0.0
    %88 = vmatprep.subr.mxu0 0.0
    %89 = vmatpush1.msra.mxu0 0.0
    %90 = vmatprep.subr.mxu0 0.0
    %91 = vmatpush1.msra.mxu0 %v32
    %92 = vmatprep.subr.mxu0 0.0
    %93 = vmatpush1.msra.mxu0 %v31
    %94 = vmatprep.subr.mxu0 0.0
    %95 = vmatpush1.msra.mxu0 %v30
    %96 = vmatprep.subr.mxu0 0.0
    %97 = vmatpush1.msra.mxu0 %v29
    %98 = vmatprep.subr.mxu0 0.0
    %99 = vmatpush2.msra.mxu0 0.0
    %100 = vmatprep.subr.mxu0 0.0
    %101 = vmatpush2.msra.mxu0 0.0
    %102 = vmatprep.subr.mxu0 0.0
    %103 = vmatpush2.msra.mxu0 0.0
    %104 = vmatprep.subr.mxu0 0.0
    %105 = vmatpush2.msra.mxu0 0.0
    %106 = vmatprep.subr.mxu0 0.0
    %107 = vmatpush2.msra.mxu0 0.0
    %108 = vmatprep.subr.mxu0 0.0
    %109 = vmatpush2.msra.mxu0 0.0
    %110 = vmatprep.subr.mxu0 0.0
    %111 = vmatpush2.msra.mxu0 0.0
    %112 = vmatprep.subr.mxu0 0.0
    %113 = vmatpush2.msra.mxu0 0.0
    %114 = vmatprep.subr.mxu0 0.0
    %115 = vmatpush2.msra.mxu0 0.0
    %116 = vmatprep.subr.mxu0 0.0
    %117 = vmatpush2.msra.mxu0 0.0
    %118 = vmatprep.subr.mxu0 0.0
    %119 = vmatpush2.msra.mxu0 0.0
    %120 = vmatprep.subr.mxu0 0.0
    %121 = vmatpush2.msra.mxu0 0.0
    %122 = vmatprep.subr.mxu0 0.0
    %123 = vmatpush2.msra.mxu0 0.0
    %124 = vmatprep.subr.mxu0 0.0
    %125 = vmatpush2.msra.mxu0 0.0
    %126 = vmatprep.subr.mxu0 0.0
    %127 = vmatpush2.msra.mxu0 0.0
    %128 = vmatprep.subr.mxu0 0.0
    %129 = vmatpush2.msra.mxu0 0.0
    %130 = vmatprep.mubr.f32.mxu0 0.0
    %131 = vmatmul.mubr.f32.gmra.mxu0 %v64
    %v132 = vpop.f32.mrf.mxu0
    %v133 = vadd.f32 %v45, %v132
    %v134 = vpop.f32.mrf.mxu0
    %135 = vdwg.mxu0
    %v136 = vmul.f32 %v133, %v61
    %v137 = vtanh.pop %v136
    %v138 = vmul.f32 %v137, 0.5
    %v139 = vadd.f32 %v138, 0.5
    %v140 = vsel %vm60, %v137, %v139
    %141 = vrot.lane.b32.xlu0 %v28, 32
    %v142 = vpop.permute.xlu0 %141
    %v144 = vmul.f32 %v140, %v142
    %146 = vrot.lane.b32.xlu0 %v140, 64
    %v147 = vpop.permute.xlu0 %146
    %v149 = vmul.f32 %v140, %v147
    %151 = vrot.lane.b32.xlu0 %v149, 32
    %v152 = vpop.permute.xlu0 %151
    %v154 = vadd.f32 %v144, %v152
    %v155 = vtanh.pop %v154
    %157 = vrot.lane.b32.xlu0 %v155, 64
    %v158 = vpop.permute.xlu0 %157
    %v160 = vmul.f32 %v140, %v158
    %162 = vrot.lane.b32.xlu0 %v160, 32
    %v163 = vpop.permute.xlu0 %162
    %v164 = vsel %vm62, %v163, 0
    %166 = vmatprep.subr.mxu0 0.0
    %167 = vmatpush1.msra.mxu0 0.0
    %168 = vmatprep.subr.mxu0 0.0
    %169 = vmatpush1.msra.mxu0 0.0
    %170 = vmatprep.subr.mxu0 0.0
    %171 = vmatpush1.msra.mxu0 0.0
    %172 = vmatprep.subr.mxu0 0.0
    %173 = vmatpush1.msra.mxu0 0.0
    %174 = vmatprep.subr.mxu0 0.0
    %175 = vmatpush1.msra.mxu0 0.0
    %176 = vmatprep.subr.mxu0 0.0
    %177 = vmatpush1.msra.mxu0 0.0
    %178 = vmatprep.subr.mxu0 0.0
    %179 = vmatpush1.msra.mxu0 0.0
    %180 = vmatprep.subr.mxu0 0.0
    %181 = vmatpush1.msra.mxu0 0.0
    %182 = vmatprep.subr.mxu0 0.0
    %183 = vmatpush1.msra.mxu0 0.0
    %184 = vmatprep.subr.mxu0 0.0
    %185 = vmatpush1.msra.mxu0 0.0
    %186 = vmatprep.subr.mxu0 0.0
    %187 = vmatpush1.msra.mxu0 0.0
    %188 = vmatprep.subr.mxu0 0.0
    %189 = vmatpush1.msra.mxu0 0.0
    %190 = vmatprep.subr.mxu0 0.0
    %191 = vmatpush1.msra.mxu0 %v40
    %192 = vmatprep.subr.mxu0 0.0
    %193 = vmatpush1.msra.mxu0 %v39
    %194 = vmatprep.subr.mxu0 0.0
    %195 = vmatpush1.msra.mxu0 %v38
    %196 = vmatprep.subr.mxu0 0.0
    %197 = vmatpush1.msra.mxu0 %v37
    %198 = vmatprep.subr.mxu0 0.0
    %199 = vmatpush2.msra.mxu0 0.0
    %200 = vmatprep.subr.mxu0 0.0
    %201 = vmatpush2.msra.mxu0 0.0
    %202 = vmatprep.subr.mxu0 0.0
    %203 = vmatpush2.msra.mxu0 0.0
    %204 = vmatprep.subr.mxu0 0.0
    %205 = vmatpush2.msra.mxu0 0.0
    %206 = vmatprep.subr.mxu0 0.0
    %207 = vmatpush2.msra.mxu0 0.0
    %208 = vmatprep.subr.mxu0 0.0
    %209 = vmatpush2.msra.mxu0 0.0
    %210 = vmatprep.subr.mxu0 0.0
    %211 = vmatpush2.msra.mxu0 0.0
    %212 = vmatprep.subr.mxu0 0.0
    %213 = vmatpush2.msra.mxu0 0.0
    %214 = vmatprep.subr.mxu0 0.0
    %215 = vmatpush2.msra.mxu0 0.0
    %216 = vmatprep.subr.mxu0 0.0
    %217 = vmatpush2.msra.mxu0 0.0
    %218 = vmatprep.subr.mxu0 0.0
    %219 = vmatpush2.msra.mxu0 0.0
    %220 = vmatprep.subr.mxu0 0.0
    %221 = vmatpush2.msra.mxu0 0.0
    %222 = vmatprep.subr.mxu0 0.0
    %223 = vmatpush2.msra.mxu0 0.0
    %224 = vmatprep.subr.mxu0 0.0
    %225 = vmatpush2.msra.mxu0 0.0
    %226 = vmatprep.subr.mxu0 0.0
    %227 = vmatpush2.msra.mxu0 0.0
    %228 = vmatprep.subr.mxu0 0.0
    %229 = vmatpush2.msra.mxu0 0.0
    %230 = vmatprep.mubr.f32.mxu0 0.0
    %231 = vmatmul.mubr.f32.gmra.mxu0 %v164
    %v232 = vpop.f32.mrf.mxu0
    %v233 = vadd.f32 %v55, %v232
    %v234 = vpop.f32.mrf.mxu0
    %235 = vdwg.mxu0
    %236 = vst.msk [vmem:[%s3] sm:$0xff] %vm62, %v233
    %237 = vmatprep.subr.mxu0 0.0
    %238 = vmatpush1.msra.mxu0 0.0
    %239 = vmatprep.subr.mxu0 0.0
    %240 = vmatpush1.msra.mxu0 0.0
    %241 = vmatprep.subr.mxu0 0.0
    %242 = vmatpush1.msra.mxu0 0.0
    %243 = vmatprep.subr.mxu0 0.0
    %244 = vmatpush1.msra.mxu0 0.0
    %245 = vmatprep.subr.mxu0 0.0
    %246 = vmatpush1.msra.mxu0 0.0
    %247 = vmatprep.subr.mxu0 0.0
    %248 = vmatpush1.msra.mxu0 0.0
    %249 = vmatprep.subr.mxu0 0.0
    %250 = vmatpush1.msra.mxu0 0.0
    %251 = vmatprep.subr.mxu0 0.0
    %252 = vmatpush1.msra.mxu0 0.0
    %253 = vmatprep.subr.mxu0 0.0
    %254 = vmatpush1.msra.mxu0 0.0
    %255 = vmatprep.subr.mxu0 0.0
    %256 = vmatpush1.msra.mxu0 0.0
    %257 = vmatprep.subr.mxu0 0.0
    %258 = vmatpush1.msra.mxu0 0.0
    %259 = vmatprep.subr.mxu0 0.0
    %260 = vmatpush1.msra.mxu0 0.0
    %261 = vmatprep.subr.mxu0 0.0
    %262 = vmatpush1.msra.mxu0 %v36
    %263 = vmatprep.subr.mxu0 0.0
    %264 = vmatpush1.msra.mxu0 %v35
    %265 = vmatprep.subr.mxu0 0.0
    %266 = vmatpush1.msra.mxu0 %v34
    %267 = vmatprep.subr.mxu0 0.0
    %268 = vmatpush1.msra.mxu0 %v33
    %269 = vmatprep.subr.mxu0 0.0
    %270 = vmatpush2.msra.mxu0 0.0
    %271 = vmatprep.subr.mxu0 0.0
    %272 = vmatpush2.msra.mxu0 0.0
    %273 = vmatprep.subr.mxu0 0.0
    %274 = vmatpush2.msra.mxu0 0.0
    %275 = vmatprep.subr.mxu0 0.0
    %276 = vmatpush2.msra.mxu0 0.0
    %277 = vmatprep.subr.mxu0 0.0
    %278 = vmatpush2.msra.mxu0 0.0
    %279 = vmatprep.subr.mxu0 0.0
    %280 = vmatpush2.msra.mxu0 0.0
    %281 = vmatprep.subr.mxu0 0.0
    %282 = vmatpush2.msra.mxu0 0.0
    %283 = vmatprep.subr.mxu0 0.0
    %284 = vmatpush2.msra.mxu0 0.0
    %285 = vmatprep.subr.mxu0 0.0
    %286 = vmatpush2.msra.mxu0 0.0
    %287 = vmatprep.subr.mxu0 0.0
    %288 = vmatpush2.msra.mxu0 0.0
    %289 = vmatprep.subr.mxu0 0.0
    %290 = vmatpush2.msra.mxu0 0.0
    %291 = vmatprep.subr.mxu0 0.0
    %292 = vmatpush2.msra.mxu0 0.0
    %293 = vmatprep.subr.mxu0 0.0
    %294 = vmatpush2.msra.mxu0 0.0
    %295 = vmatprep.subr.mxu0 0.0
    %296 = vmatpush2.msra.mxu0 0.0
    %297 = vmatprep.subr.mxu0 0.0
    %298 = vmatpush2.msra.mxu0 0.0
    %299 = vmatprep.subr.mxu0 0.0
    %300 = vmatpush2.msra.mxu0 0.0
    %301 = vmatprep.mubr.f32.mxu0 0.0
    %302 = vmatmul.mubr.f32.gmra.mxu0 %v164
    %v303 = vpop.f32.mrf.mxu0
    %v304 = vadd.f32 %v50, %v303
    %v305 = vpop.f32.mrf.mxu0
    %306 = vdwg.mxu0
    %v307 = vmul.f32 %v304, %v61
    %v308 = vtanh.pop %v307
    %v309 = vmul.f32 %v308, 0.5
    %v310 = vadd.f32 %v309, 0.5
    %v311 = vsel %vm60, %v308, %v310
    %v312 = vmul.f32 %v311, %v154
    %314 = vrot.lane.b32.xlu0 %v311, 64
    %v315 = vpop.permute.xlu0 %314
    %v317 = vmul.f32 %v311, %v315
    %319 = vrot.lane.b32.xlu0 %v317, 32
    %v320 = vpop.permute.xlu0 %319
    %v322 = vadd.f32 %v312, %v320
    %v323 = vtanh.pop %v322
    %325 = vrot.lane.b32.xlu0 %v323, 64
    %v326 = vpop.permute.xlu0 %325
    %v328 = vmul.f32 %v311, %v326
    %330 = vrot.lane.b32.xlu0 %v328, 32
    %v331 = vpop.permute.xlu0 %330
    %v332 = vsel %vm62, %v331, 0
    %334 = vmatprep.subr.mxu0 0.0
    %335 = vmatpush1.msra.mxu0 0.0
    %336 = vmatprep.subr.mxu0 0.0
    %337 = vmatpush1.msra.mxu0 0.0
    %338 = vmatprep.subr.mxu0 0.0
    %339 = vmatpush1.msra.mxu0 0.0
    %340 = vmatprep.subr.mxu0 0.0
    %341 = vmatpush1.msra.mxu0 0.0
    %342 = vmatprep.subr.mxu0 0.0
    %343 = vmatpush1.msra.mxu0 0.0
    %344 = vmatprep.subr.mxu0 0.0
    %345 = vmatpush1.msra.mxu0 0.0
    %346 = vmatprep.subr.mxu0 0.0
    %347 = vmatpush1.msra.mxu0 0.0
    %348 = vmatprep.subr.mxu0 0.0
    %349 = vmatpush1.msra.mxu0 0.0
    %350 = vmatprep.subr.mxu0 0.0
    %351 = vmatpush1.msra.mxu0 0.0
    %352 = vmatprep.subr.mxu0 0.0
    %353 = vmatpush1.msra.mxu0 0.0
    %354 = vmatprep.subr.mxu0 0.0
    %355 = vmatpush1.msra.mxu0 0.0
    %356 = vmatprep.subr.mxu0 0.0
    %357 = vmatpush1.msra.mxu0 0.0
    %358 = vmatprep.subr.mxu0 0.0
    %359 = vmatpush1.msra.mxu0 %v40
    %360 = vmatprep.subr.mxu0 0.0
    %361 = vmatpush1.msra.mxu0 %v39
    %362 = vmatprep.subr.mxu0 0.0
    %363 = vmatpush1.msra.mxu0 %v38
    %364 = vmatprep.subr.mxu0 0.0
    %365 = vmatpush1.msra.mxu0 %v37
    %366 = vmatprep.subr.mxu0 0.0
    %367 = vmatpush2.msra.mxu0 0.0
    %368 = vmatprep.subr.mxu0 0.0
    %369 = vmatpush2.msra.mxu0 0.0
    %370 = vmatprep.subr.mxu0 0.0
    %371 = vmatpush2.msra.mxu0 0.0
    %372 = vmatprep.subr.mxu0 0.0
    %373 = vmatpush2.msra.mxu0 0.0
    %374 = vmatprep.subr.mxu0 0.0
    %375 = vmatpush2.msra.mxu0 0.0
    %376 = vmatprep.subr.mxu0 0.0
    %377 = vmatpush2.msra.mxu0 0.0
    %378 = vmatprep.subr.mxu0 0.0
    %379 = vmatpush2.msra.mxu0 0.0
    %380 = vmatprep.subr.mxu0 0.0
    %381 = vmatpush2.msra.mxu0 0.0
    %382 = vmatprep.subr.mxu0 0.0
    %383 = vmatpush2.msra.mxu0 0.0
    %384 = vmatprep.subr.mxu0 0.0
    %385 = vmatpush2.msra.mxu0 0.0
    %386 = vmatprep.subr.mxu0 0.0
    %387 = vmatpush2.msra.mxu0 0.0
    %388 = vmatprep.subr.mxu0 0.0
    %389 = vmatpush2.msra.mxu0 0.0
    %390 = vmatprep.subr.mxu0 0.0
    %391 = vmatpush2.msra.mxu0 0.0
    %392 = vmatprep.subr.mxu0 0.0
    %393 = vmatpush2.msra.mxu0 0.0
    %394 = vmatprep.subr.mxu0 0.0
    %395 = vmatpush2.msra.mxu0 0.0
    %396 = vmatprep.subr.mxu0 0.0
    %397 = vmatpush2.msra.mxu0 0.0
    %398 = vmatprep.mubr.f32.mxu0 0.0
    %399 = vmatmul.mubr.f32.gmra.mxu0 %v332
    %v400 = vpop.f32.mrf.mxu0
    %v401 = vadd.f32 %v55, %v400
    %v402 = vpop.f32.mrf.mxu0
    %403 = vdwg.mxu0
    %405 = vrot.lane.b32.xlu0 %v401, 32
    %v406 = vpop.permute.xlu0 %405
    %vm408 = vcmask 523520
    %409 = vst.msk [vmem:[%s3] sm:$0xff] %vm408, %v406
    %410 = vmatprep.subr.mxu0 0.0
    %411 = vmatpush1.msra.mxu0 0.0
    %412 = vmatprep.subr.mxu0 0.0
    %413 = vmatpush1.msra.mxu0 0.0
    %414 = vmatprep.subr.mxu0 0.0
    %415 = vmatpush1.msra.mxu0 0.0
    %416 = vmatprep.subr.mxu0 0.0
    %417 = vmatpush1.msra.mxu0 0.0
    %418 = vmatprep.subr.mxu0 0.0
    %419 = vmatpush1.msra.mxu0 0.0
    %420 = vmatprep.subr.mxu0 0.0
    %421 = vmatpush1.msra.mxu0 0.0
    %422 = vmatprep.subr.mxu0 0.0
    %423 = vmatpush1.msra.mxu0 0.0
    %424 = vmatprep.subr.mxu0 0.0
    %425 = vmatpush1.msra.mxu0 0.0
    %426 = vmatprep.subr.mxu0 0.0
    %427 = vmatpush1.msra.mxu0 0.0
    %428 = vmatprep.subr.mxu0 0.0
    %429 = vmatpush1.msra.mxu0 0.0
    %430 = vmatprep.subr.mxu0 0.0
    %431 = vmatpush1.msra.mxu0 0.0
    %432 = vmatprep.subr.mxu0 0.0
    %433 = vmatpush1.msra.mxu0 0.0
    %434 = vmatprep.subr.mxu0 0.0
    %435 = vmatpush1.msra.mxu0 %v36
    %436 = vmatprep.subr.mxu0 0.0
    %437 = vmatpush1.msra.mxu0 %v35
    %438 = vmatprep.subr.mxu0 0.0
    %439 = vmatpush1.msra.mxu0 %v34
    %440 = vmatprep.subr.mxu0 0.0
    %441 = vmatpush1.msra.mxu0 %v33
    %442 = vmatprep.subr.mxu0 0.0
    %443 = vmatpush2.msra.mxu0 0.0
    %444 = vmatprep.subr.mxu0 0.0
    %445 = vmatpush2.msra.mxu0 0.0
    %446 = vmatprep.subr.mxu0 0.0
    %447 = vmatpush2.msra.mxu0 0.0
    %448 = vmatprep.subr.mxu0 0.0
    %449 = vmatpush2.msra.mxu0 0.0
    %450 = vmatprep.subr.mxu0 0.0
    %451 = vmatpush2.msra.mxu0 0.0
    %452 = vmatprep.subr.mxu0 0.0
    %453 = vmatpush2.msra.mxu0 0.0
    %454 = vmatprep.subr.mxu0 0.0
    %455 = vmatpush2.msra.mxu0 0.0
    %456 = vmatprep.subr.mxu0 0.0
    %457 = vmatpush2.msra.mxu0 0.0
    %458 = vmatprep.subr.mxu0 0.0
    %459 = vmatpush2.msra.mxu0 0.0
    %460 = vmatprep.subr.mxu0 0.0
    %461 = vmatpush2.msra.mxu0 0.0
    %462 = vmatprep.subr.mxu0 0.0
    %463 = vmatpush2.msra.mxu0 0.0
    %464 = vmatprep.subr.mxu0 0.0
    %465 = vmatpush2.msra.mxu0 0.0
    %466 = vmatprep.subr.mxu0 0.0
    %467 = vmatpush2.msra.mxu0 0.0
    %468 = vmatprep.subr.mxu0 0.0
    %469 = vmatpush2.msra.mxu0 0.0
    %470 = vmatprep.subr.mxu0 0.0
    %471 = vmatpush2.msra.mxu0 0.0
    %472 = vmatprep.subr.mxu0 0.0
    %473 = vmatpush2.msra.mxu0 0.0
    %474 = vmatprep.mubr.f32.mxu0 0.0
    %475 = vmatmul.mubr.f32.gmra.mxu0 %v332
    %v476 = vpop.f32.mrf.mxu0
    %v477 = vadd.f32 %v50, %v476
    %v478 = vpop.f32.mrf.mxu0
    %479 = vdwg.mxu0
    %v480 = vmul.f32 %v477, %v61
    %v481 = vtanh.pop %v480
    %v482 = vmul.f32 %v481, 0.5
    %v483 = vadd.f32 %v482, 0.5
    %v484 = vsel %vm60, %v481, %v483
    %v485 = vmul.f32 %v484, %v322
    %487 = vrot.lane.b32.xlu0 %v484, 64
    %v488 = vpop.permute.xlu0 %487
    %v490 = vmul.f32 %v484, %v488
    %492 = vrot.lane.b32.xlu0 %v490, 32
    %v493 = vpop.permute.xlu0 %492
    %v495 = vadd.f32 %v485, %v493
    %v496 = vtanh.pop %v495
    %498 = vrot.lane.b32.xlu0 %v496, 64
    %v499 = vpop.permute.xlu0 %498
    %v501 = vmul.f32 %v484, %v499
    %503 = vrot.lane.b32.xlu0 %v501, 32
    %v504 = vpop.permute.xlu0 %503
    %v505 = vsel %vm62, %v504, 0
    %507 = vmatprep.subr.mxu0 0.0
    %508 = vmatpush1.msra.mxu0 0.0
    %509 = vmatprep.subr.mxu0 0.0
    %510 = vmatpush1.msra.mxu0 0.0
    %511 = vmatprep.subr.mxu0 0.0
    %512 = vmatpush1.msra.mxu0 0.0
    %513 = vmatprep.subr.mxu0 0.0
    %514 = vmatpush1.msra.mxu0 0.0
    %515 = vmatprep.subr.mxu0 0.0
    %516 = vmatpush1.msra.mxu0 0.0
    %517 = vmatprep.subr.mxu0 0.0
    %518 = vmatpush1.msra.mxu0 0.0
    %519 = vmatprep.subr.mxu0 0.0
    %520 = vmatpush1.msra.mxu0 0.0
    %521 = vmatprep.subr.mxu0 0.0
    %522 = vmatpush1.msra.mxu0 0.0
    %523 = vmatprep.subr.mxu0 0.0
    %524 = vmatpush1.msra.mxu0 0.0
    %525 = vmatprep.subr.mxu0 0.0
    %526 = vmatpush1.msra.mxu0 0.0
    %527 = vmatprep.subr.mxu0 0.0
    %528 = vmatpush1.msra.mxu0 0.0
    %529 = vmatprep.subr.mxu0 0.0
    %530 = vmatpush1.msra.mxu0 0.0
    %531 = vmatprep.subr.mxu0 0.0
    %532 = vmatpush1.msra.mxu0 %v40
    %533 = vmatprep.subr.mxu0 0.0
    %534 = vmatpush1.msra.mxu0 %v39
    %535 = vmatprep.subr.mxu0 0.0
    %536 = vmatpush1.msra.mxu0 %v38
    %537 = vmatprep.subr.mxu0 0.0
    %538 = vmatpush1.msra.mxu0 %v37
    %539 = vmatprep.subr.mxu0 0.0
    %540 = vmatpush2.msra.mxu0 0.0
    %541 = vmatprep.subr.mxu0 0.0
    %542 = vmatpush2.msra.mxu0 0.0
    %543 = vmatprep.subr.mxu0 0.0
    %544 = vmatpush2.msra.mxu0 0.0
    %545 = vmatprep.subr.mxu0 0.0
    %546 = vmatpush2.msra.mxu0 0.0
    %547 = vmatprep.subr.mxu0 0.0
    %548 = vmatpush2.msra.mxu0 0.0
    %549 = vmatprep.subr.mxu0 0.0
    %550 = vmatpush2.msra.mxu0 0.0
    %551 = vmatprep.subr.mxu0 0.0
    %552 = vmatpush2.msra.mxu0 0.0
    %553 = vmatprep.subr.mxu0 0.0
    %554 = vmatpush2.msra.mxu0 0.0
    %555 = vmatprep.subr.mxu0 0.0
    %556 = vmatpush2.msra.mxu0 0.0
    %557 = vmatprep.subr.mxu0 0.0
    %558 = vmatpush2.msra.mxu0 0.0
    %559 = vmatprep.subr.mxu0 0.0
    %560 = vmatpush2.msra.mxu0 0.0
    %561 = vmatprep.subr.mxu0 0.0
    %562 = vmatpush2.msra.mxu0 0.0
    %563 = vmatprep.subr.mxu0 0.0
    %564 = vmatpush2.msra.mxu0 0.0
    %565 = vmatprep.subr.mxu0 0.0
    %566 = vmatpush2.msra.mxu0 0.0
    %567 = vmatprep.subr.mxu0 0.0
    %568 = vmatpush2.msra.mxu0 0.0
    %569 = vmatprep.subr.mxu0 0.0
    %570 = vmatpush2.msra.mxu0 0.0
    %571 = vmatprep.mubr.f32.mxu0 0.0
    %572 = vmatmul.mubr.f32.gmra.mxu0 %v505
    %v573 = vpop.f32.mrf.mxu0
    %v574 = vadd.f32 %v55, %v573
    %v575 = vpop.f32.mrf.mxu0
    %576 = vdwg.mxu0
    %578 = vrot.lane.b32.xlu0 %v574, 64
    %v579 = vpop.permute.xlu0 %578
    %vm581 = vcmask 785920
    %582 = vst.msk [vmem:[%s3] sm:$0xff] %vm581, %v579
    %583 = vmatprep.subr.mxu0 0.0
    %584 = vmatpush1.msra.mxu0 0.0
    %585 = vmatprep.subr.mxu0 0.0
    %586 = vmatpush1.msra.mxu0 0.0
    %587 = vmatprep.subr.mxu0 0.0
    %588 = vmatpush1.msra.mxu0 0.0
    %589 = vmatprep.subr.mxu0 0.0
    %590 = vmatpush1.msra.mxu0 0.0
    %591 = vmatprep.subr.mxu0 0.0
    %592 = vmatpush1.msra.mxu0 0.0
    %593 = vmatprep.subr.mxu0 0.0
    %594 = vmatpush1.msra.mxu0 0.0
    %595 = vmatprep.subr.mxu0 0.0
    %596 = vmatpush1.msra.mxu0 0.0
    %597 = vmatprep.subr.mxu0 0.0
    %598 = vmatpush1.msra.mxu0 0.0
    %599 = vmatprep.subr.mxu0 0.0
    %600 = vmatpush1.msra.mxu0 0.0
    %601 = vmatprep.subr.mxu0 0.0
    %602 = vmatpush1.msra.mxu0 0.0
    %603 = vmatprep.subr.mxu0 0.0
    %604 = vmatpush1.msra.mxu0 0.0
    %605 = vmatprep.subr.mxu0 0.0
    %606 = vmatpush1.msra.mxu0 0.0
    %607 = vmatprep.subr.mxu0 0.0
    %608 = vmatpush1.msra.mxu0 %v36
    %609 = vmatprep.subr.mxu0 0.0
    %610 = vmatpush1.msra.mxu0 %v35
    %611 = vmatprep.subr.mxu0 0.0
    %612 = vmatpush1.msra.mxu0 %v34
    %613 = vmatprep.subr.mxu0 0.0
    %614 = vmatpush1.msra.mxu0 %v33
    %615 = vmatprep.subr.mxu0 0.0
    %616 = vmatpush2.msra.mxu0 0.0
    %617 = vmatprep.subr.mxu0 0.0
    %618 = vmatpush2.msra.mxu0 0.0
    %619 = vmatprep.subr.mxu0 0.0
    %620 = vmatpush2.msra.mxu0 0.0
    %621 = vmatprep.subr.mxu0 0.0
    %622 = vmatpush2.msra.mxu0 0.0
    %623 = vmatprep.subr.mxu0 0.0
    %624 = vmatpush2.msra.mxu0 0.0
    %625 = vmatprep.subr.mxu0 0.0
    %626 = vmatpush2.msra.mxu0 0.0
    %627 = vmatprep.subr.mxu0 0.0
    %628 = vmatpush2.msra.mxu0 0.0
    %629 = vmatprep.subr.mxu0 0.0
    %630 = vmatpush2.msra.mxu0 0.0
    %631 = vmatprep.subr.mxu0 0.0
    %632 = vmatpush2.msra.mxu0 0.0
    %633 = vmatprep.subr.mxu0 0.0
    %634 = vmatpush2.msra.mxu0 0.0
    %635 = vmatprep.subr.mxu0 0.0
    %636 = vmatpush2.msra.mxu0 0.0
    %637 = vmatprep.subr.mxu0 0.0
    %638 = vmatpush2.msra.mxu0 0.0
    %639 = vmatprep.subr.mxu0 0.0
    %640 = vmatpush2.msra.mxu0 0.0
    %641 = vmatprep.subr.mxu0 0.0
    %642 = vmatpush2.msra.mxu0 0.0
    %643 = vmatprep.subr.mxu0 0.0
    %644 = vmatpush2.msra.mxu0 0.0
    %645 = vmatprep.subr.mxu0 0.0
    %646 = vmatpush2.msra.mxu0 0.0
    %647 = vmatprep.mubr.f32.mxu0 0.0
    %648 = vmatmul.mubr.f32.gmra.mxu0 %v505
    %v649 = vpop.f32.mrf.mxu0
    %v650 = vadd.f32 %v50, %v649
    %v651 = vpop.f32.mrf.mxu0
    %652 = vdwg.mxu0
    %v653 = vmul.f32 %v650, %v61
    %v654 = vtanh.pop %v653
    %v655 = vmul.f32 %v654, 0.5
    %v656 = vadd.f32 %v655, 0.5
    %v657 = vsel %vm60, %v654, %v656
    %v658 = vmul.f32 %v657, %v495
    %660 = vrot.lane.b32.xlu0 %v657, 64
    %v661 = vpop.permute.xlu0 %660
    %v663 = vmul.f32 %v657, %v661
    %665 = vrot.lane.b32.xlu0 %v663, 32
    %v666 = vpop.permute.xlu0 %665
    %v668 = vadd.f32 %v658, %v666
    %v669 = vtanh.pop %v668
    %671 = vrot.lane.b32.xlu0 %v669, 64
    %v672 = vpop.permute.xlu0 %671
    %v674 = vmul.f32 %v657, %v672
    %676 = vrot.lane.b32.xlu0 %v674, 32
    %v677 = vpop.permute.xlu0 %676
    %v678 = vsel %vm62, %v677, 0
    %680 = vmatprep.subr.mxu0 0.0
    %681 = vmatpush1.msra.mxu0 0.0
    %682 = vmatprep.subr.mxu0 0.0
    %683 = vmatpush1.msra.mxu0 0.0
    %684 = vmatprep.subr.mxu0 0.0
    %685 = vmatpush1.msra.mxu0 0.0
    %686 = vmatprep.subr.mxu0 0.0
    %687 = vmatpush1.msra.mxu0 0.0
    %688 = vmatprep.subr.mxu0 0.0
    %689 = vmatpush1.msra.mxu0 0.0
    %690 = vmatprep.subr.mxu0 0.0
    %691 = vmatpush1.msra.mxu0 0.0
    %692 = vmatprep.subr.mxu0 0.0
    %693 = vmatpush1.msra.mxu0 0.0
    %694 = vmatprep.subr.mxu0 0.0
    %695 = vmatpush1.msra.mxu0 0.0
    %696 = vmatprep.subr.mxu0 0.0
    %697 = vmatpush1.msra.mxu0 0.0
    %698 = vmatprep.subr.mxu0 0.0
    %699 = vmatpush1.msra.mxu0 0.0
    %700 = vmatprep.subr.mxu0 0.0
    %701 = vmatpush1.msra.mxu0 0.0
    %702 = vmatprep.subr.mxu0 0.0
    %703 = vmatpush1.msra.mxu0 0.0
    %704 = vmatprep.subr.mxu0 0.0
    %705 = vmatpush1.msra.mxu0 %v40
    %706 = vmatprep.subr.mxu0 0.0
    %707 = vmatpush1.msra.mxu0 %v39
    %708 = vmatprep.subr.mxu0 0.0
    %709 = vmatpush1.msra.mxu0 %v38
    %710 = vmatprep.subr.mxu0 0.0
    %711 = vmatpush1.msra.mxu0 %v37
    %712 = vmatprep.subr.mxu0 0.0
    %713 = vmatpush2.msra.mxu0 0.0
    %714 = vmatprep.subr.mxu0 0.0
    %715 = vmatpush2.msra.mxu0 0.0
    %716 = vmatprep.subr.mxu0 0.0
    %717 = vmatpush2.msra.mxu0 0.0
    %718 = vmatprep.subr.mxu0 0.0
    %719 = vmatpush2.msra.mxu0 0.0
    %720 = vmatprep.subr.mxu0 0.0
    %721 = vmatpush2.msra.mxu0 0.0
    %722 = vmatprep.subr.mxu0 0.0
    %723 = vmatpush2.msra.mxu0 0.0
    %724 = vmatprep.subr.mxu0 0.0
    %725 = vmatpush2.msra.mxu0 0.0
    %726 = vmatprep.subr.mxu0 0.0
    %727 = vmatpush2.msra.mxu0 0.0
    %728 = vmatprep.subr.mxu0 0.0
    %729 = vmatpush2.msra.mxu0 0.0
    %730 = vmatprep.subr.mxu0 0.0
    %731 = vmatpush2.msra.mxu0 0.0
    %732 = vmatprep.subr.mxu0 0.0
    %733 = vmatpush2.msra.mxu0 0.0
    %734 = vmatprep.subr.mxu0 0.0
    %735 = vmatpush2.msra.mxu0 0.0
    %736 = vmatprep.subr.mxu0 0.0
    %737 = vmatpush2.msra.mxu0 0.0
    %738 = vmatprep.subr.mxu0 0.0
    %739 = vmatpush2.msra.mxu0 0.0
    %740 = vmatprep.subr.mxu0 0.0
    %741 = vmatpush2.msra.mxu0 0.0
    %742 = vmatprep.subr.mxu0 0.0
    %743 = vmatpush2.msra.mxu0 0.0
    %744 = vmatprep.mubr.f32.mxu0 0.0
    %745 = vmatmul.mubr.f32.gmra.mxu0 %v678
    %v746 = vpop.f32.mrf.mxu0
    %v747 = vadd.f32 %v55, %v746
    %v748 = vpop.f32.mrf.mxu0
    %749 = vdwg.mxu0
    %751 = vrot.lane.b32.xlu0 %v747, 96
    %v752 = vpop.permute.xlu0 %751
    %vm754 = vcmask 1048320
    %755 = vst.msk [vmem:[%s3] sm:$0xff] %vm754, %v752
    %756 = vmatprep.subr.mxu0 0.0
    %757 = vmatpush1.msra.mxu0 0.0
    %758 = vmatprep.subr.mxu0 0.0
    %759 = vmatpush1.msra.mxu0 0.0
    %760 = vmatprep.subr.mxu0 0.0
    %761 = vmatpush1.msra.mxu0 0.0
    %762 = vmatprep.subr.mxu0 0.0
    %763 = vmatpush1.msra.mxu0 0.0
    %764 = vmatprep.subr.mxu0 0.0
    %765 = vmatpush1.msra.mxu0 0.0
    %766 = vmatprep.subr.mxu0 0.0
    %767 = vmatpush1.msra.mxu0 0.0
    %768 = vmatprep.subr.mxu0 0.0
    %769 = vmatpush1.msra.mxu0 0.0
    %770 = vmatprep.subr.mxu0 0.0
    %771 = vmatpush1.msra.mxu0 0.0
    %772 = vmatprep.subr.mxu0 0.0
    %773 = vmatpush1.msra.mxu0 0.0
    %774 = vmatprep.subr.mxu0 0.0
    %775 = vmatpush1.msra.mxu0 0.0
    %776 = vmatprep.subr.mxu0 0.0
    %777 = vmatpush1.msra.mxu0 0.0
    %778 = vmatprep.subr.mxu0 0.0
    %779 = vmatpush1.msra.mxu0 0.0
    %780 = vmatprep.subr.mxu0 0.0
    %781 = vmatpush1.msra.mxu0 %v36
    %782 = vmatprep.subr.mxu0 0.0
    %783 = vmatpush1.msra.mxu0 %v35
    %784 = vmatprep.subr.mxu0 0.0
    %785 = vmatpush1.msra.mxu0 %v34
    %786 = vmatprep.subr.mxu0 0.0
    %787 = vmatpush1.msra.mxu0 %v33
    %788 = vmatprep.subr.mxu0 0.0
    %789 = vmatpush2.msra.mxu0 0.0
    %790 = vmatprep.subr.mxu0 0.0
    %791 = vmatpush2.msra.mxu0 0.0
    %792 = vmatprep.subr.mxu0 0.0
    %793 = vmatpush2.msra.mxu0 0.0
    %794 = vmatprep.subr.mxu0 0.0
    %795 = vmatpush2.msra.mxu0 0.0
    %796 = vmatprep.subr.mxu0 0.0
    %797 = vmatpush2.msra.mxu0 0.0
    %798 = vmatprep.subr.mxu0 0.0
    %799 = vmatpush2.msra.mxu0 0.0
    %800 = vmatprep.subr.mxu0 0.0
    %801 = vmatpush2.msra.mxu0 0.0
    %802 = vmatprep.subr.mxu0 0.0
    %803 = vmatpush2.msra.mxu0 0.0
    %804 = vmatprep.subr.mxu0 0.0
    %805 = vmatpush2.msra.mxu0 0.0
    %806 = vmatprep.subr.mxu0 0.0
    %807 = vmatpush2.msra.mxu0 0.0
    %808 = vmatprep.subr.mxu0 0.0
    %809 = vmatpush2.msra.mxu0 0.0
    %810 = vmatprep.subr.mxu0 0.0
    %811 = vmatpush2.msra.mxu0 0.0
    %812 = vmatprep.subr.mxu0 0.0
    %813 = vmatpush2.msra.mxu0 0.0
    %814 = vmatprep.subr.mxu0 0.0
    %815 = vmatpush2.msra.mxu0 0.0
    %816 = vmatprep.subr.mxu0 0.0
    %817 = vmatpush2.msra.mxu0 0.0
    %818 = vmatprep.subr.mxu0 0.0
    %819 = vmatpush2.msra.mxu0 0.0
    %820 = vmatprep.mubr.f32.mxu0 0.0
    %821 = vmatmul.mubr.f32.gmra.mxu0 %v678
    %v822 = vpop.f32.mrf.mxu0
    %v823 = vadd.f32 %v50, %v822
    %v824 = vpop.f32.mrf.mxu0
    %825 = vdwg.mxu0
    %v826 = vmul.f32 %v823, %v61
    %v827 = vtanh.pop %v826
    %v828 = vmul.f32 %v827, 0.5
    %v829 = vadd.f32 %v828, 0.5
    %v830 = vsel %vm60, %v827, %v829
    %v831 = vmul.f32 %v830, %v668
    %833 = vrot.lane.b32.xlu0 %v830, 64
    %v834 = vpop.permute.xlu0 %833
    %v836 = vmul.f32 %v830, %v834
    %838 = vrot.lane.b32.xlu0 %v836, 32
    %v839 = vpop.permute.xlu0 %838
    %v841 = vadd.f32 %v831, %v839
    %v842 = vtanh.pop %v841
    %844 = vrot.lane.b32.xlu0 %v842, 64
    %v845 = vpop.permute.xlu0 %844
    %v847 = vmul.f32 %v830, %v845
    %849 = vrot.lane.b32.xlu0 %v847, 32
    %v850 = vpop.permute.xlu0 %849
    %v851 = vsel %vm62, %v850, 0
    %853 = vmatprep.subr.mxu0 0.0
    %854 = vmatpush1.msra.mxu0 0.0
    %855 = vmatprep.subr.mxu0 0.0
    %856 = vmatpush1.msra.mxu0 0.0
    %857 = vmatprep.subr.mxu0 0.0
    %858 = vmatpush1.msra.mxu0 0.0
    %859 = vmatprep.subr.mxu0 0.0
    %860 = vmatpush1.msra.mxu0 0.0
    %861 = vmatprep.subr.mxu0 0.0
    %862 = vmatpush1.msra.mxu0 0.0
    %863 = vmatprep.subr.mxu0 0.0
    %864 = vmatpush1.msra.mxu0 0.0
    %865 = vmatprep.subr.mxu0 0.0
    %866 = vmatpush1.msra.mxu0 0.0
    %867 = vmatprep.subr.mxu0 0.0
    %868 = vmatpush1.msra.mxu0 0.0
    %869 = vmatprep.subr.mxu0 0.0
    %870 = vmatpush1.msra.mxu0 0.0
    %871 = vmatprep.subr.mxu0 0.0
    %872 = vmatpush1.msra.mxu0 0.0
    %873 = vmatprep.subr.mxu0 0.0
    %874 = vmatpush1.msra.mxu0 0.0
    %875 = vmatprep.subr.mxu0 0.0
    %876 = vmatpush1.msra.mxu0 0.0
    %877 = vmatprep.subr.mxu0 0.0
    %878 = vmatpush1.msra.mxu0 %v40
    %879 = vmatprep.subr.mxu0 0.0
    %880 = vmatpush1.msra.mxu0 %v39
    %881 = vmatprep.subr.mxu0 0.0
    %882 = vmatpush1.msra.mxu0 %v38
    %883 = vmatprep.subr.mxu0 0.0
    %884 = vmatpush1.msra.mxu0 %v37
    %885 = vmatprep.subr.mxu0 0.0
    %886 = vmatpush2.msra.mxu0 0.0
    %887 = vmatprep.subr.mxu0 0.0
    %888 = vmatpush2.msra.mxu0 0.0
    %889 = vmatprep.subr.mxu0 0.0
    %890 = vmatpush2.msra.mxu0 0.0
    %891 = vmatprep.subr.mxu0 0.0
    %892 = vmatpush2.msra.mxu0 0.0
    %893 = vmatprep.subr.mxu0 0.0
    %894 = vmatpush2.msra.mxu0 0.0
    %895 = vmatprep.subr.mxu0 0.0
    %896 = vmatpush2.msra.mxu0 0.0
    %897 = vmatprep.subr.mxu0 0.0
    %898 = vmatpush2.msra.mxu0 0.0
    %899 = vmatprep.subr.mxu0 0.0
    %900 = vmatpush2.msra.mxu0 0.0
    %901 = vmatprep.subr.mxu0 0.0
    %902 = vmatpush2.msra.mxu0 0.0
    %903 = vmatprep.subr.mxu0 0.0
    %904 = vmatpush2.msra.mxu0 0.0
    %905 = vmatprep.subr.mxu0 0.0
    %906 = vmatpush2.msra.mxu0 0.0
    %907 = vmatprep.subr.mxu0 0.0
    %908 = vmatpush2.msra.mxu0 0.0
    %909 = vmatprep.subr.mxu0 0.0
    %910 = vmatpush2.msra.mxu0 0.0
    %911 = vmatprep.subr.mxu0 0.0
    %912 = vmatpush2.msra.mxu0 0.0
    %913 = vmatprep.subr.mxu0 0.0
    %914 = vmatpush2.msra.mxu0 0.0
    %915 = vmatprep.subr.mxu0 0.0
    %916 = vmatpush2.msra.mxu0 0.0
    %917 = vmatprep.mubr.f32.mxu0 0.0
    %918 = vmatmul.mubr.f32.gmra.mxu0 %v851
    %v919 = vpop.f32.mrf.mxu0
    %v920 = vadd.f32 %v55, %v919
    %v921 = vpop.f32.mrf.mxu0
    %922 = vdwg.mxu0
    %923 = vst.msk [vmem:[%s3 + $0x8] sm:$0xff] %vm62, %v920
    %924 = vmatprep.subr.mxu0 0.0
    %925 = vmatpush1.msra.mxu0 0.0
    %926 = vmatprep.subr.mxu0 0.0
    %927 = vmatpush1.msra.mxu0 0.0
    %928 = vmatprep.subr.mxu0 0.0
    %929 = vmatpush1.msra.mxu0 0.0
    %930 = vmatprep.subr.mxu0 0.0
    %931 = vmatpush1.msra.mxu0 0.0
    %932 = vmatprep.subr.mxu0 0.0
    %933 = vmatpush1.msra.mxu0 0.0
    %934 = vmatprep.subr.mxu0 0.0
    %935 = vmatpush1.msra.mxu0 0.0
    %936 = vmatprep.subr.mxu0 0.0
    %937 = vmatpush1.msra.mxu0 0.0
    %938 = vmatprep.subr.mxu0 0.0
    %939 = vmatpush1.msra.mxu0 0.0
    %940 = vmatprep.subr.mxu0 0.0
    %941 = vmatpush1.msra.mxu0 0.0
    %942 = vmatprep.subr.mxu0 0.0
    %943 = vmatpush1.msra.mxu0 0.0
    %944 = vmatprep.subr.mxu0 0.0
    %945 = vmatpush1.msra.mxu0 0.0
    %946 = vmatprep.subr.mxu0 0.0
    %947 = vmatpush1.msra.mxu0 0.0
    %948 = vmatprep.subr.mxu0 0.0
    %949 = vmatpush1.msra.mxu0 %v36
    %950 = vmatprep.subr.mxu0 0.0
    %951 = vmatpush1.msra.mxu0 %v35
    %952 = vmatprep.subr.mxu0 0.0
    %953 = vmatpush1.msra.mxu0 %v34
    %954 = vmatprep.subr.mxu0 0.0
    %955 = vmatpush1.msra.mxu0 %v33
    %956 = vmatprep.subr.mxu0 0.0
    %957 = vmatpush2.msra.mxu0 0.0
    %958 = vmatprep.subr.mxu0 0.0
    %959 = vmatpush2.msra.mxu0 0.0
    %960 = vmatprep.subr.mxu0 0.0
    %961 = vmatpush2.msra.mxu0 0.0
    %962 = vmatprep.subr.mxu0 0.0
    %963 = vmatpush2.msra.mxu0 0.0
    %964 = vmatprep.subr.mxu0 0.0
    %965 = vmatpush2.msra.mxu0 0.0
    %966 = vmatprep.subr.mxu0 0.0
    %967 = vmatpush2.msra.mxu0 0.0
    %968 = vmatprep.subr.mxu0 0.0
    %969 = vmatpush2.msra.mxu0 0.0
    %970 = vmatprep.subr.mxu0 0.0
    %971 = vmatpush2.msra.mxu0 0.0
    %972 = vmatprep.subr.mxu0 0.0
    %973 = vmatpush2.msra.mxu0 0.0
    %974 = vmatprep.subr.mxu0 0.0
    %975 = vmatpush2.msra.mxu0 0.0
    %976 = vmatprep.subr.mxu0 0.0
    %977 = vmatpush2.msra.mxu0 0.0
    %978 = vmatprep.subr.mxu0 0.0
    %979 = vmatpush2.msra.mxu0 0.0
    %980 = vmatprep.subr.mxu0 0.0
    %981 = vmatpush2.msra.mxu0 0.0
    %982 = vmatprep.subr.mxu0 0.0
    %983 = vmatpush2.msra.mxu0 0.0
    %984 = vmatprep.subr.mxu0 0.0
    %985 = vmatpush2.msra.mxu0 0.0
    %986 = vmatprep.subr.mxu0 0.0
    %987 = vmatpush2.msra.mxu0 0.0
    %988 = vmatprep.mubr.f32.mxu0 0.0
    %989 = vmatmul.mubr.f32.gmra.mxu0 %v851
    %v990 = vpop.f32.mrf.mxu0
    %v991 = vadd.f32 %v50, %v990
    %v992 = vpop.f32.mrf.mxu0
    %993 = vdwg.mxu0
    %v994 = vmul.f32 %v991, %v61
    %v995 = vtanh.pop %v994
    %v996 = vmul.f32 %v995, 0.5
    %v997 = vadd.f32 %v996, 0.5
    %v998 = vsel %vm60, %v995, %v997
    %v999 = vmul.f32 %v998, %v841
    %1001 = vrot.lane.b32.xlu0 %v998, 64
    %v1002 = vpop.permute.xlu0 %1001
    %v1004 = vmul.f32 %v998, %v1002
    %1006 = vrot.lane.b32.xlu0 %v1004, 32
    %v1007 = vpop.permute.xlu0 %1006
    %v1009 = vadd.f32 %v999, %v1007
    %v1010 = vtanh.pop %v1009
    %1012 = vrot.lane.b32.xlu0 %v1010, 64
    %v1013 = vpop.permute.xlu0 %1012
    %v1015 = vmul.f32 %v998, %v1013
    %1017 = vrot.lane.b32.xlu0 %v1015, 32
    %v1018 = vpop.permute.xlu0 %1017
    %v1019 = vsel %vm62, %v1018, 0
    %1021 = vmatprep.subr.mxu0 0.0
    %1022 = vmatpush1.msra.mxu0 0.0
    %1023 = vmatprep.subr.mxu0 0.0
    %1024 = vmatpush1.msra.mxu0 0.0
    %1025 = vmatprep.subr.mxu0 0.0
    %1026 = vmatpush1.msra.mxu0 0.0
    %1027 = vmatprep.subr.mxu0 0.0
    %1028 = vmatpush1.msra.mxu0 0.0
    %1029 = vmatprep.subr.mxu0 0.0
    %1030 = vmatpush1.msra.mxu0 0.0
    %1031 = vmatprep.subr.mxu0 0.0
    %1032 = vmatpush1.msra.mxu0 0.0
    %1033 = vmatprep.subr.mxu0 0.0
    %1034 = vmatpush1.msra.mxu0 0.0
    %1035 = vmatprep.subr.mxu0 0.0
    %1036 = vmatpush1.msra.mxu0 0.0
    %1037 = vmatprep.subr.mxu0 0.0
    %1038 = vmatpush1.msra.mxu0 0.0
    %1039 = vmatprep.subr.mxu0 0.0
    %1040 = vmatpush1.msra.mxu0 0.0
    %1041 = vmatprep.subr.mxu0 0.0
    %1042 = vmatpush1.msra.mxu0 0.0
    %1043 = vmatprep.subr.mxu0 0.0
    %1044 = vmatpush1.msra.mxu0 0.0
    %1045 = vmatprep.subr.mxu0 0.0
    %1046 = vmatpush1.msra.mxu0 %v40
    %1047 = vmatprep.subr.mxu0 0.0
    %1048 = vmatpush1.msra.mxu0 %v39
    %1049 = vmatprep.subr.mxu0 0.0
    %1050 = vmatpush1.msra.mxu0 %v38
    %1051 = vmatprep.subr.mxu0 0.0
    %1052 = vmatpush1.msra.mxu0 %v37
    %1053 = vmatprep.subr.mxu0 0.0
    %1054 = vmatpush2.msra.mxu0 0.0
    %1055 = vmatprep.subr.mxu0 0.0
    %1056 = vmatpush2.msra.mxu0 0.0
    %1057 = vmatprep.subr.mxu0 0.0
    %1058 = vmatpush2.msra.mxu0 0.0
    %1059 = vmatprep.subr.mxu0 0.0
    %1060 = vmatpush2.msra.mxu0 0.0
    %1061 = vmatprep.subr.mxu0 0.0
    %1062 = vmatpush2.msra.mxu0 0.0
    %1063 = vmatprep.subr.mxu0 0.0
    %1064 = vmatpush2.msra.mxu0 0.0
    %1065 = vmatprep.subr.mxu0 0.0
    %1066 = vmatpush2.msra.mxu0 0.0
    %1067 = vmatprep.subr.mxu0 0.0
    %1068 = vmatpush2.msra.mxu0 0.0
    %1069 = vmatprep.subr.mxu0 0.0
    %1070 = vmatpush2.msra.mxu0 0.0
    %1071 = vmatprep.subr.mxu0 0.0
    %1072 = vmatpush2.msra.mxu0 0.0
    %1073 = vmatprep.subr.mxu0 0.0
    %1074 = vmatpush2.msra.mxu0 0.0
    %1075 = vmatprep.subr.mxu0 0.0
    %1076 = vmatpush2.msra.mxu0 0.0
    %1077 = vmatprep.subr.mxu0 0.0
    %1078 = vmatpush2.msra.mxu0 0.0
    %1079 = vmatprep.subr.mxu0 0.0
    %1080 = vmatpush2.msra.mxu0 0.0
    %1081 = vmatprep.subr.mxu0 0.0
    %1082 = vmatpush2.msra.mxu0 0.0
    %1083 = vmatprep.subr.mxu0 0.0
    %1084 = vmatpush2.msra.mxu0 0.0
    %1085 = vmatprep.mubr.f32.mxu0 0.0
    %1086 = vmatmul.mubr.f32.gmra.mxu0 %v1019
    %v1087 = vpop.f32.mrf.mxu0
    %v1088 = vadd.f32 %v55, %v1087
    %v1089 = vpop.f32.mrf.mxu0
    %1090 = vdwg.mxu0
    %1092 = vrot.lane.b32.xlu0 %v1088, 32
    %v1093 = vpop.permute.xlu0 %1092
    %1095 = vst.msk [vmem:[%s3 + $0x8] sm:$0xff] %vm408, %v1093
    %1096 = vmatprep.subr.mxu0 0.0
    %1097 = vmatpush1.msra.mxu0 0.0
    %1098 = vmatprep.subr.mxu0 0.0
    %1099 = vmatpush1.msra.mxu0 0.0
    %1100 = vmatprep.subr.mxu0 0.0
    %1101 = vmatpush1.msra.mxu0 0.0
    %1102 = vmatprep.subr.mxu0 0.0
    %1103 = vmatpush1.msra.mxu0 0.0
    %1104 = vmatprep.subr.mxu0 0.0
    %1105 = vmatpush1.msra.mxu0 0.0
    %1106 = vmatprep.subr.mxu0 0.0
    %1107 = vmatpush1.msra.mxu0 0.0
    %1108 = vmatprep.subr.mxu0 0.0
    %1109 = vmatpush1.msra.mxu0 0.0
    %1110 = vmatprep.subr.mxu0 0.0
    %1111 = vmatpush1.msra.mxu0 0.0
    %1112 = vmatprep.subr.mxu0 0.0
    %1113 = vmatpush1.msra.mxu0 0.0
    %1114 = vmatprep.subr.mxu0 0.0
    %1115 = vmatpush1.msra.mxu0 0.0
    %1116 = vmatprep.subr.mxu0 0.0
    %1117 = vmatpush1.msra.mxu0 0.0
    %1118 = vmatprep.subr.mxu0 0.0
    %1119 = vmatpush1.msra.mxu0 0.0
    %1120 = vmatprep.subr.mxu0 0.0
    %1121 = vmatpush1.msra.mxu0 %v36
    %1122 = vmatprep.subr.mxu0 0.0
    %1123 = vmatpush1.msra.mxu0 %v35
    %1124 = vmatprep.subr.mxu0 0.0
    %1125 = vmatpush1.msra.mxu0 %v34
    %1126 = vmatprep.subr.mxu0 0.0
    %1127 = vmatpush1.msra.mxu0 %v33
    %1128 = vmatprep.subr.mxu0 0.0
    %1129 = vmatpush2.msra.mxu0 0.0
    %1130 = vmatprep.subr.mxu0 0.0
    %1131 = vmatpush2.msra.mxu0 0.0
    %1132 = vmatprep.subr.mxu0 0.0
    %1133 = vmatpush2.msra.mxu0 0.0
    %1134 = vmatprep.subr.mxu0 0.0
    %1135 = vmatpush2.msra.mxu0 0.0
    %1136 = vmatprep.subr.mxu0 0.0
    %1137 = vmatpush2.msra.mxu0 0.0
    %1138 = vmatprep.subr.mxu0 0.0
    %1139 = vmatpush2.msra.mxu0 0.0
    %1140 = vmatprep.subr.mxu0 0.0
    %1141 = vmatpush2.msra.mxu0 0.0
    %1142 = vmatprep.subr.mxu0 0.0
    %1143 = vmatpush2.msra.mxu0 0.0
    %1144 = vmatprep.subr.mxu0 0.0
    %1145 = vmatpush2.msra.mxu0 0.0
    %1146 = vmatprep.subr.mxu0 0.0
    %1147 = vmatpush2.msra.mxu0 0.0
    %1148 = vmatprep.subr.mxu0 0.0
    %1149 = vmatpush2.msra.mxu0 0.0
    %1150 = vmatprep.subr.mxu0 0.0
    %1151 = vmatpush2.msra.mxu0 0.0
    %1152 = vmatprep.subr.mxu0 0.0
    %1153 = vmatpush2.msra.mxu0 0.0
    %1154 = vmatprep.subr.mxu0 0.0
    %1155 = vmatpush2.msra.mxu0 0.0
    %1156 = vmatprep.subr.mxu0 0.0
    %1157 = vmatpush2.msra.mxu0 0.0
    %1158 = vmatprep.subr.mxu0 0.0
    %1159 = vmatpush2.msra.mxu0 0.0
    %1160 = vmatprep.mubr.f32.mxu0 0.0
    %1161 = vmatmul.mubr.f32.gmra.mxu0 %v1019
    %v1162 = vpop.f32.mrf.mxu0
    %v1163 = vadd.f32 %v50, %v1162
    %v1164 = vpop.f32.mrf.mxu0
    %1165 = vdwg.mxu0
    %v1166 = vmul.f32 %v1163, %v61
    %v1167 = vtanh.pop %v1166
    %v1168 = vmul.f32 %v1167, 0.5
    %v1169 = vadd.f32 %v1168, 0.5
    %v1170 = vsel %vm60, %v1167, %v1169
    %v1171 = vmul.f32 %v1170, %v1009
    %1173 = vrot.lane.b32.xlu0 %v1170, 64
    %v1174 = vpop.permute.xlu0 %1173
    %v1176 = vmul.f32 %v1170, %v1174
    %1178 = vrot.lane.b32.xlu0 %v1176, 32
    %v1179 = vpop.permute.xlu0 %1178
    %v1181 = vadd.f32 %v1171, %v1179
    %v1182 = vtanh.pop %v1181
    %1184 = vrot.lane.b32.xlu0 %v1182, 64
    %v1185 = vpop.permute.xlu0 %1184
    %v1187 = vmul.f32 %v1170, %v1185
    %1189 = vrot.lane.b32.xlu0 %v1187, 32
    %v1190 = vpop.permute.xlu0 %1189
    %v1191 = vsel %vm62, %v1190, 0
    %1193 = vmatprep.subr.mxu0 0.0
    %1194 = vmatpush1.msra.mxu0 0.0
    %1195 = vmatprep.subr.mxu0 0.0
    %1196 = vmatpush1.msra.mxu0 0.0
    %1197 = vmatprep.subr.mxu0 0.0
    %1198 = vmatpush1.msra.mxu0 0.0
    %1199 = vmatprep.subr.mxu0 0.0
    %1200 = vmatpush1.msra.mxu0 0.0
    %1201 = vmatprep.subr.mxu0 0.0
    %1202 = vmatpush1.msra.mxu0 0.0
    %1203 = vmatprep.subr.mxu0 0.0
    %1204 = vmatpush1.msra.mxu0 0.0
    %1205 = vmatprep.subr.mxu0 0.0
    %1206 = vmatpush1.msra.mxu0 0.0
    %1207 = vmatprep.subr.mxu0 0.0
    %1208 = vmatpush1.msra.mxu0 0.0
    %1209 = vmatprep.subr.mxu0 0.0
    %1210 = vmatpush1.msra.mxu0 0.0
    %1211 = vmatprep.subr.mxu0 0.0
    %1212 = vmatpush1.msra.mxu0 0.0
    %1213 = vmatprep.subr.mxu0 0.0
    %1214 = vmatpush1.msra.mxu0 0.0
    %1215 = vmatprep.subr.mxu0 0.0
    %1216 = vmatpush1.msra.mxu0 0.0
    %1217 = vmatprep.subr.mxu0 0.0
    %1218 = vmatpush1.msra.mxu0 %v40
    %1219 = vmatprep.subr.mxu0 0.0
    %1220 = vmatpush1.msra.mxu0 %v39
    %1221 = vmatprep.subr.mxu0 0.0
    %1222 = vmatpush1.msra.mxu0 %v38
    %1223 = vmatprep.subr.mxu0 0.0
    %1224 = vmatpush1.msra.mxu0 %v37
    %1225 = vmatprep.subr.mxu0 0.0
    %1226 = vmatpush2.msra.mxu0 0.0
    %1227 = vmatprep.subr.mxu0 0.0
    %1228 = vmatpush2.msra.mxu0 0.0
    %1229 = vmatprep.subr.mxu0 0.0
    %1230 = vmatpush2.msra.mxu0 0.0
    %1231 = vmatprep.subr.mxu0 0.0
    %1232 = vmatpush2.msra.mxu0 0.0
    %1233 = vmatprep.subr.mxu0 0.0
    %1234 = vmatpush2.msra.mxu0 0.0
    %1235 = vmatprep.subr.mxu0 0.0
    %1236 = vmatpush2.msra.mxu0 0.0
    %1237 = vmatprep.subr.mxu0 0.0
    %1238 = vmatpush2.msra.mxu0 0.0
    %1239 = vmatprep.subr.mxu0 0.0
    %1240 = vmatpush2.msra.mxu0 0.0
    %1241 = vmatprep.subr.mxu0 0.0
    %1242 = vmatpush2.msra.mxu0 0.0
    %1243 = vmatprep.subr.mxu0 0.0
    %1244 = vmatpush2.msra.mxu0 0.0
    %1245 = vmatprep.subr.mxu0 0.0
    %1246 = vmatpush2.msra.mxu0 0.0
    %1247 = vmatprep.subr.mxu0 0.0
    %1248 = vmatpush2.msra.mxu0 0.0
    %1249 = vmatprep.subr.mxu0 0.0
    %1250 = vmatpush2.msra.mxu0 0.0
    %1251 = vmatprep.subr.mxu0 0.0
    %1252 = vmatpush2.msra.mxu0 0.0
    %1253 = vmatprep.subr.mxu0 0.0
    %1254 = vmatpush2.msra.mxu0 0.0
    %1255 = vmatprep.subr.mxu0 0.0
    %1256 = vmatpush2.msra.mxu0 0.0
    %1257 = vmatprep.mubr.f32.mxu0 0.0
    %1258 = vmatmul.mubr.f32.gmra.mxu0 %v1191
    %v1259 = vpop.f32.mrf.mxu0
    %v1260 = vadd.f32 %v55, %v1259
    %v1261 = vpop.f32.mrf.mxu0
    %1262 = vdwg.mxu0
    %1264 = vrot.lane.b32.xlu0 %v1260, 64
    %v1265 = vpop.permute.xlu0 %1264
    %1267 = vst.msk [vmem:[%s3 + $0x8] sm:$0xff] %vm581, %v1265
    %1268 = vmatprep.subr.mxu0 0.0
    %1269 = vmatpush1.msra.mxu0 0.0
    %1270 = vmatprep.subr.mxu0 0.0
    %1271 = vmatpush1.msra.mxu0 0.0
    %1272 = vmatprep.subr.mxu0 0.0
    %1273 = vmatpush1.msra.mxu0 0.0
    %1274 = vmatprep.subr.mxu0 0.0
    %1275 = vmatpush1.msra.mxu0 0.0
    %1276 = vmatprep.subr.mxu0 0.0
    %1277 = vmatpush1.msra.mxu0 0.0
    %1278 = vmatprep.subr.mxu0 0.0
    %1279 = vmatpush1.msra.mxu0 0.0
    %1280 = vmatprep.subr.mxu0 0.0
    %1281 = vmatpush1.msra.mxu0 0.0
    %1282 = vmatprep.subr.mxu0 0.0
    %1283 = vmatpush1.msra.mxu0 0.0
    %1284 = vmatprep.subr.mxu0 0.0
    %1285 = vmatpush1.msra.mxu0 0.0
    %1286 = vmatprep.subr.mxu0 0.0
    %1287 = vmatpush1.msra.mxu0 0.0
    %1288 = vmatprep.subr.mxu0 0.0
    %1289 = vmatpush1.msra.mxu0 0.0
    %1290 = vmatprep.subr.mxu0 0.0
    %1291 = vmatpush1.msra.mxu0 0.0
    %1292 = vmatprep.subr.mxu0 0.0
    %1293 = vmatpush1.msra.mxu0 %v36
    %1294 = vmatprep.subr.mxu0 0.0
    %1295 = vmatpush1.msra.mxu0 %v35
    %1296 = vmatprep.subr.mxu0 0.0
    %1297 = vmatpush1.msra.mxu0 %v34
    %1298 = vmatprep.subr.mxu0 0.0
    %1299 = vmatpush1.msra.mxu0 %v33
    %1300 = vmatprep.subr.mxu0 0.0
    %1301 = vmatpush2.msra.mxu0 0.0
    %1302 = vmatprep.subr.mxu0 0.0
    %1303 = vmatpush2.msra.mxu0 0.0
    %1304 = vmatprep.subr.mxu0 0.0
    %1305 = vmatpush2.msra.mxu0 0.0
    %1306 = vmatprep.subr.mxu0 0.0
    %1307 = vmatpush2.msra.mxu0 0.0
    %1308 = vmatprep.subr.mxu0 0.0
    %1309 = vmatpush2.msra.mxu0 0.0
    %1310 = vmatprep.subr.mxu0 0.0
    %1311 = vmatpush2.msra.mxu0 0.0
    %1312 = vmatprep.subr.mxu0 0.0
    %1313 = vmatpush2.msra.mxu0 0.0
    %1314 = vmatprep.subr.mxu0 0.0
    %1315 = vmatpush2.msra.mxu0 0.0
    %1316 = vmatprep.subr.mxu0 0.0
    %1317 = vmatpush2.msra.mxu0 0.0
    %1318 = vmatprep.subr.mxu0 0.0
    %1319 = vmatpush2.msra.mxu0 0.0
    %1320 = vmatprep.subr.mxu0 0.0
    %1321 = vmatpush2.msra.mxu0 0.0
    %1322 = vmatprep.subr.mxu0 0.0
    %1323 = vmatpush2.msra.mxu0 0.0
    %1324 = vmatprep.subr.mxu0 0.0
    %1325 = vmatpush2.msra.mxu0 0.0
    %1326 = vmatprep.subr.mxu0 0.0
    %1327 = vmatpush2.msra.mxu0 0.0
    %1328 = vmatprep.subr.mxu0 0.0
    %1329 = vmatpush2.msra.mxu0 0.0
    %1330 = vmatprep.subr.mxu0 0.0
    %1331 = vmatpush2.msra.mxu0 0.0
    %1332 = vmatprep.mubr.f32.mxu0 0.0
    %1333 = vmatmul.mubr.f32.gmra.mxu0 %v1191
    %v1334 = vpop.f32.mrf.mxu0
    %v1335 = vadd.f32 %v50, %v1334
    %v1336 = vpop.f32.mrf.mxu0
    %1337 = vdwg.mxu0
    %v1338 = vmul.f32 %v1335, %v61
    %v1339 = vtanh.pop %v1338
    %v1340 = vmul.f32 %v1339, 0.5
    %v1341 = vadd.f32 %v1340, 0.5
    %v1342 = vsel %vm60, %v1339, %v1341
    %v1343 = vmul.f32 %v1342, %v1181
    %1345 = vrot.lane.b32.xlu0 %v1342, 64
    %v1346 = vpop.permute.xlu0 %1345
    %v1348 = vmul.f32 %v1342, %v1346
    %1350 = vrot.lane.b32.xlu0 %v1348, 32
    %v1351 = vpop.permute.xlu0 %1350
    %v1353 = vadd.f32 %v1343, %v1351
    %v1354 = vtanh.pop %v1353
    %1356 = vrot.lane.b32.xlu0 %v1354, 64
    %v1357 = vpop.permute.xlu0 %1356
    %v1359 = vmul.f32 %v1342, %v1357
    %1361 = vrot.lane.b32.xlu0 %v1359, 32
    %v1362 = vpop.permute.xlu0 %1361
    %v1363 = vsel %vm62, %v1362, 0
    %1365 = vmatprep.subr.mxu0 0.0
    %1366 = vmatpush1.msra.mxu0 0.0
    %1367 = vmatprep.subr.mxu0 0.0
    %1368 = vmatpush1.msra.mxu0 0.0
    %1369 = vmatprep.subr.mxu0 0.0
    %1370 = vmatpush1.msra.mxu0 0.0
    %1371 = vmatprep.subr.mxu0 0.0
    %1372 = vmatpush1.msra.mxu0 0.0
    %1373 = vmatprep.subr.mxu0 0.0
    %1374 = vmatpush1.msra.mxu0 0.0
    %1375 = vmatprep.subr.mxu0 0.0
    %1376 = vmatpush1.msra.mxu0 0.0
    %1377 = vmatprep.subr.mxu0 0.0
    %1378 = vmatpush1.msra.mxu0 0.0
    %1379 = vmatprep.subr.mxu0 0.0
    %1380 = vmatpush1.msra.mxu0 0.0
    %1381 = vmatprep.subr.mxu0 0.0
    %1382 = vmatpush1.msra.mxu0 0.0
    %1383 = vmatprep.subr.mxu0 0.0
    %1384 = vmatpush1.msra.mxu0 0.0
    %1385 = vmatprep.subr.mxu0 0.0
    %1386 = vmatpush1.msra.mxu0 0.0
    %1387 = vmatprep.subr.mxu0 0.0
    %1388 = vmatpush1.msra.mxu0 0.0
    %1389 = vmatprep.subr.mxu0 0.0
    %1390 = vmatpush1.msra.mxu0 %v40
    %1391 = vmatprep.subr.mxu0 0.0
    %1392 = vmatpush1.msra.mxu0 %v39
    %1393 = vmatprep.subr.mxu0 0.0
    %1394 = vmatpush1.msra.mxu0 %v38
    %1395 = vmatprep.subr.mxu0 0.0
    %1396 = vmatpush1.msra.mxu0 %v37
    %1397 = vmatprep.subr.mxu0 0.0
    %1398 = vmatpush2.msra.mxu0 0.0
    %1399 = vmatprep.subr.mxu0 0.0
    %1400 = vmatpush2.msra.mxu0 0.0
    %1401 = vmatprep.subr.mxu0 0.0
    %1402 = vmatpush2.msra.mxu0 0.0
    %1403 = vmatprep.subr.mxu0 0.0
    %1404 = vmatpush2.msra.mxu0 0.0
    %1405 = vmatprep.subr.mxu0 0.0
    %1406 = vmatpush2.msra.mxu0 0.0
    %1407 = vmatprep.subr.mxu0 0.0
    %1408 = vmatpush2.msra.mxu0 0.0
    %1409 = vmatprep.subr.mxu0 0.0
    %1410 = vmatpush2.msra.mxu0 0.0
    %1411 = vmatprep.subr.mxu0 0.0
    %1412 = vmatpush2.msra.mxu0 0.0
    %1413 = vmatprep.subr.mxu0 0.0
    %1414 = vmatpush2.msra.mxu0 0.0
    %1415 = vmatprep.subr.mxu0 0.0
    %1416 = vmatpush2.msra.mxu0 0.0
    %1417 = vmatprep.subr.mxu0 0.0
    %1418 = vmatpush2.msra.mxu0 0.0
    %1419 = vmatprep.subr.mxu0 0.0
    %1420 = vmatpush2.msra.mxu0 0.0
    %1421 = vmatprep.subr.mxu0 0.0
    %1422 = vmatpush2.msra.mxu0 0.0
    %1423 = vmatprep.subr.mxu0 0.0
    %1424 = vmatpush2.msra.mxu0 0.0
    %1425 = vmatprep.subr.mxu0 0.0
    %1426 = vmatpush2.msra.mxu0 0.0
    %1427 = vmatprep.subr.mxu0 0.0
    %1428 = vmatpush2.msra.mxu0 0.0
    %1429 = vmatprep.mubr.f32.mxu0 0.0
    %1430 = vmatmul.mubr.f32.gmra.mxu0 %v1363
    %v1431 = vpop.f32.mrf.mxu0
    %v1432 = vadd.f32 %v55, %v1431
    %v1433 = vpop.f32.mrf.mxu0
    %1434 = vdwg.mxu0
    %1436 = vrot.lane.b32.xlu0 %v1432, 96
    %v1437 = vpop.permute.xlu0 %1436
    %1439 = vst.msk [vmem:[%s3 + $0x8] sm:$0xff] %vm754, %v1437
    // Predicated region
    $region18: #{forward.1} parent=1 // pred_check
      _
    $region19: #{forward.1} parent=1 // pred_check_branch
      %1441 = sbr.rel (0) target = $region21
    $region20: #{forward.1} parent=1 // pred_region
      _
    $region21: #{forward.1} parent=1 // pred_fallthru
      _
    // Predicated region
    $region22: #{forward.1} parent=1 // pred_check
      _
    $region23: #{forward.1} parent=1 // pred_check_branch
      %1443 = sbr.rel (0) target = $region25
    $region24: #{forward.1} parent=1 // pred_region
      _
    $region25: #{forward.1} parent=1 // pred_fallthru
      _
    %1444 = vsyncpa [#allocation3], 1

</llo_original>
